<compile_context>
chip_gen: v7x
topology: tpu7x:2x2x1
jax: 0.10.0
libtpu: 0.0.40
codegen_flags: <defaults>
</compile_context>

<pallas_src>
import math
import jax
import jax.numpy as jnp
from jax.experimental import pallas as pl
from jax.experimental.pallas import tpu as pltpu

# ---- model hyperparameters (small, consistent with the module) --------------
D_MODEL = 32
N_HEAD = 4
HEAD_DIM = D_MODEL // N_HEAD
DIM_FF = 64
NUM_LAYERS = 2
SEQ = 8
BATCH = 2
LN_EPS = 1e-5

# Set to jnp.bfloat16 on v6e/v7x at realistic shapes (full MXU rate, half the
# weight DMA bytes / VMEM). Kept f32 here for faithfulness; on v5e keep all
# elementwise/softmax/LayerNorm math f32 regardless (no bf16 VPU/EUP there).
MXU_IN_DTYPE = jnp.float32


def _layer_norm(h, gamma, beta):
    mu = jnp.mean(h, axis=-1, keepdims=True)
    var = jnp.mean((h - mu) ** 2, axis=-1, keepdims=True)
    return (h - mu) * jax.lax.rsqrt(var + LN_EPS) * gamma + beta


def _mm(a, b):
    return jnp.dot(a.astype(MXU_IN_DTYPE), b.astype(MXU_IN_DTYPE),
                   preferred_element_type=jnp.float32)


# ---------------------------------------------------------------------------
# Fused kernel: one grid step = (one batch element, one encoder layer).
# ---------------------------------------------------------------------------
def fused_encoder_kernel(x_ref, pe_ref, wqkv_ref, wo_ref, w1_ref, w2_ref,
                         bqkv_ref, b1_ref, dvec_ref, o_ref, xf_ref):
    S, D = xf_ref.shape
    H, HD = N_HEAD, HEAD_DIM
    l = pl.program_id(1)

    # layer 0: add positional encoding and initialize the residual-stream carry
    @pl.when(l == 0)
    def _():
        xf_ref[...] = (x_ref[0].astype(jnp.float32)
                       + pe_ref[...].astype(jnp.float32))

    xf = xf_ref[...]

    # Constant per-head lane masks; heads occupy disjoint lanes of the D axis.
    # The 1/sqrt(HD) scale is folded into the Q-side mask.
    col = jax.lax.broadcasted_iota(jnp.int32, (H, 1, D), 2)
    hid = jax.lax.broadcasted_iota(jnp.int32, (H, 1, D), 0)
    head_mask = ((col >= hid * HD) & (col < (hid + 1) * HD)).astype(jnp.float32)
    head_mask_q = head_mask * (1.0 / math.sqrt(HD))

    dv = dvec_ref[0]                      # (6, D): bo, ln1w, ln1b, b2, ln2w, ln2b
    bo, ln1w, ln1b = dv[0:1, :], dv[1:2, :], dv[2:3, :]
    b2, ln2w, ln2b = dv[3:4, :], dv[4:5, :], dv[5:6, :]

    # --- packed QKV projection: one MXU push (S, D) @ (D, 3D) ---
    qkv = _mm(xf, wqkv_ref[0]) + bqkv_ref[0]
    q = qkv[:, 0 * D:1 * D]
    k = qkv[:, 1 * D:2 * D]
    v = qkv[:, 2 * D:3 * D]

    # --- lane-masked multi-head attention (no broadcast-K materialization) ---
    # NOTE: contracts over all D lanes per head (H-x redundant MACs); hidden
    # under MXU slack at D=32 -- switch to a true (H,S,HD) contraction when
    # d_model / head_dim grow.
    qh = (q[None, :, :] * head_mask_q).reshape(H * S, D)      # (H*S, D)
    vh = v[None, :, :] * head_mask                            # (H, S, D)
    scores = jax.lax.dot_general(
        qh, k, (((1,), (1,)), ((), ())),
        preferred_element_type=jnp.float32).reshape(H, S, S)  # (H, S, S)

    m = jnp.max(scores, axis=-1, keepdims=True)
    e = jnp.exp(scores - m)
    p = e / jnp.sum(e, axis=-1, keepdims=True)                # exact softmax
    attn = jnp.einsum('hqk,hkd->hqd', p, vh,
                      preferred_element_type=jnp.float32)     # (H, S, D)
    # heads live on disjoint lanes -> combining heads is a leading-axis sum
    attn = jnp.sum(attn, axis=0)                              # (S, D)

    # --- output projection, residual + LayerNorm 1 ---
    attn = _mm(attn, wo_ref[0]) + bo
    h1 = _layer_norm(xf + attn, ln1w, ln1b)

    # --- feed-forward: linear2(relu(linear1(x))), residual + LayerNorm 2 ---
    f = _mm(h1, w1_ref[0]) + b1_ref[0]
    f = jnp.maximum(f, 0.0)
    f = _mm(f, w2_ref[0]) + b2
    out = _layer_norm(h1 + f, ln2w, ln2b)

    xf_ref[...] = out

    @pl.when(l == pl.num_programs(1) - 1)
    def _():
        o_ref[0] = out.astype(o_ref.dtype)


def transformer_encoder(x, pe, params):
    B, S, D = x.shape
    L = params["wqkv"].shape[0]
    F = params["w1"].shape[-1]
    H = N_HEAD
    pe_s = pe[:S, :]

    in_specs = [
        pl.BlockSpec((1, S, D),     lambda b, l: (b, 0, 0)),   # x
        pl.BlockSpec((S, D),        lambda b, l: (0, 0)),      # pe
        pl.BlockSpec((1, D, 3 * D), lambda b, l: (l, 0, 0)),   # wqkv (streamed)
        pl.BlockSpec((1, D, D),     lambda b, l: (l, 0, 0)),   # wo
        pl.BlockSpec((1, D, F),     lambda b, l: (l, 0, 0)),   # w1
        pl.BlockSpec((1, F, D),     lambda b, l: (l, 0, 0)),   # w2
        pl.BlockSpec((1, 1, 3 * D), lambda b, l: (l, 0, 0)),   # bqkv
        pl.BlockSpec((1, 1, F),     lambda b, l: (l, 0, 0)),   # b1
        pl.BlockSpec((1, 6, D),     lambda b, l: (l, 0, 0)),   # dvecs
    ]
    out_specs = pl.BlockSpec((1, S, D), lambda b, l: (b, 0, 0))

    grid_spec = pltpu.PrefetchScalarGridSpec(
        num_scalar_prefetch=0,
        grid=(B, L),
        in_specs=in_specs,
        out_specs=out_specs,
        scratch_shapes=[pltpu.VMEM((S, D), jnp.float32)],      # residual carry
    )

    # Advisory cost hint for the XLA scheduler.
    per_layer_flops = (2 * S * D * 3 * D + 2 * (2 * H * S * S * D)
                       + 2 * S * D * D + 2 * S * D * F + 2 * S * F * D)
    weight_bytes = 4 * sum(int(params[k].size) for k in
                           ("wqkv", "wo", "w1", "w2", "bqkv", "b1", "dvecs"))
    cost = pl.CostEstimate(
        flops=int(B * L * per_layer_flops),
        transcendentals=int(B * L * H * S * S),
        bytes_accessed=int(4 * (2 * x.size + pe_s.size)) + B * weight_bytes,
    )

    return pl.pallas_call(
        fused_encoder_kernel,
        out_shape=jax.ShapeDtypeStruct((B, S, D), x.dtype),
        grid_spec=grid_spec,
        compiler_params=pltpu.CompilerParams(
            dimension_semantics=("parallel", "arbitrary"),
            vmem_limit_bytes=32 * 1024 * 1024),
        cost_estimate=cost,
    )(x, pe_s, params["wqkv"], params["wo"], params["w1"], params["w2"],
      params["bqkv"], params["b1"], params["dvecs"])


# ---------------------------------------------------------------------------
# Parameter / buffer construction (deterministic, in-script)
# ---------------------------------------------------------------------------
def make_positional_encoding(max_len, d_model):
    position = jnp.arange(max_len, dtype=jnp.float32)[:, None]
    div_term = jnp.exp(jnp.arange(0, d_model, 2, dtype=jnp.float32)
                       * (-math.log(10000.0) / d_model))
    pe = jnp.zeros((max_len, d_model), dtype=jnp.float32)
    pe = pe.at[:, 0::2].set(jnp.sin(position * div_term))
    pe = pe.at[:, 1::2].set(jnp.cos(position * div_term))
    return pe


def init_layer_params(key, d_model, d_ff):
    ks = jax.random.split(key, 6)
    s = 0.05
    wq = s * jax.random.normal(ks[0], (d_model, d_model), jnp.float32)
    wk = s * jax.random.normal(ks[1], (d_model, d_model), jnp.float32)
    wv = s * jax.random.normal(ks[2], (d_model, d_model), jnp.float32)
    wo = s * jax.random.normal(ks[3], (d_model, d_model), jnp.float32)
    w1 = s * jax.random.normal(ks[4], (d_model, d_ff), jnp.float32)
    w2 = s * jax.random.normal(ks[5], (d_ff, d_model), jnp.float32)
    zeros_d = jnp.zeros((d_model,), jnp.float32)
    ones_d = jnp.ones((d_model,), jnp.float32)
    return {
        "wqkv": jnp.concatenate([wq, wk, wv], axis=1),          # (D, 3D)
        "bqkv": jnp.zeros((1, 3 * d_model), jnp.float32),       # (1, 3D)
        "wo": wo,                                               # (D, D)
        "w1": w1,                                               # (D, F)
        "b1": jnp.zeros((1, d_ff), jnp.float32),                # (1, F)
        "w2": w2,                                               # (F, D)
        # packed (6, D) vector block: bo, ln1_g, ln1_b, b2, ln2_g, ln2_b
        "dvec": jnp.stack([zeros_d, ones_d, zeros_d, zeros_d, ones_d, zeros_d]),
    }


def stack_layer_params(layer_params):
    return {
        "wqkv": jnp.stack([p["wqkv"] for p in layer_params]),   # (L, D, 3D)
        "bqkv": jnp.stack([p["bqkv"] for p in layer_params]),   # (L, 1, 3D)
        "wo":   jnp.stack([p["wo"] for p in layer_params]),     # (L, D, D)
        "w1":   jnp.stack([p["w1"] for p in layer_params]),     # (L, D, F)
        "b1":   jnp.stack([p["b1"] for p in layer_params]),     # (L, 1, F)
        "w2":   jnp.stack([p["w2"] for p in layer_params]),     # (L, F, D)
        "dvecs": jnp.stack([p["dvec"] for p in layer_params]),  # (L, 6, D)
    }


if __name__ == "__main__":
    key = jax.random.PRNGKey(0)
    k_x, k_p = jax.random.split(key)

    # input: (batch, seq, d_model)
    x = jax.random.normal(k_x, (BATCH, SEQ, D_MODEL), dtype=jnp.float32)

    pe = make_positional_encoding(max_len=5000, d_model=D_MODEL)
    layer_keys = jax.random.split(k_p, NUM_LAYERS)
    params = stack_layer_params(
        [init_layer_params(k, D_MODEL, DIM_FF) for k in layer_keys])

    out = transformer_encoder(x, pe, params)
    out = jax.block_until_ready(out)

    assert out.shape == (BATCH, SEQ, D_MODEL)
    assert bool(jnp.all(jnp.isfinite(out)))
    print("KERNEL_OK")
</pallas_src>

<mosaic_0001>
module attributes {stable_mosaic.version = 11 : i64} {
  func.func @fused_encoder_kernel(%arg0: i32, %arg1: i32, %arg2: memref<1x8x32xf32, #tpu.memory_space<vmem>>, %arg3: memref<8x32xf32, #tpu.memory_space<vmem>>, %arg4: memref<1x32x96xf32, #tpu.memory_space<vmem>>, %arg5: memref<1x32x32xf32, #tpu.memory_space<vmem>>, %arg6: memref<1x32x64xf32, #tpu.memory_space<vmem>>, %arg7: memref<1x64x32xf32, #tpu.memory_space<vmem>>, %arg8: memref<1x1x96xf32, #tpu.memory_space<vmem>>, %arg9: memref<1x1x64xf32, #tpu.memory_space<vmem>>, %arg10: memref<1x6x32xf32, #tpu.memory_space<vmem>>, %arg11: memref<1x8x32xf32, #tpu.memory_space<vmem>>, %arg12: memref<8x32xf32, #tpu.memory_space<vmem>>) attributes {dimension_semantics = [#tpu.dimension_semantics<parallel>, #tpu.dimension_semantics<arbitrary>], iteration_bounds = array<i64: 2, 2>, scalar_prefetch = 0 : i64, scratch_operands = 1 : i64, tpu.core_type = #tpu.core_type<tc>, window_params = [{transform_indices = @transform_0, window_bounds = array<i64: 1, 8, 32>}, {pipeline_mode = #tpu.pipeline_mode<synchronous>, transform_indices = @transform_1, window_bounds = array<i64: 8, 32>}, {transform_indices = @transform_2, window_bounds = array<i64: 1, 32, 96>}, {transform_indices = @transform_3, window_bounds = array<i64: 1, 32, 32>}, {transform_indices = @transform_4, window_bounds = array<i64: 1, 32, 64>}, {transform_indices = @transform_5, window_bounds = array<i64: 1, 64, 32>}, {transform_indices = @transform_6, window_bounds = array<i64: 1, 1, 96>}, {transform_indices = @transform_7, window_bounds = array<i64: 1, 1, 64>}, {transform_indices = @transform_8, window_bounds = array<i64: 1, 6, 32>}, {transform_indices = @transform_9, window_bounds = array<i64: 1, 8, 32>}]} {
    %c0_i32 = arith.constant 0 : i32
    %0 = arith.cmpi eq, %arg1, %c0_i32 : i32
    %1 = arith.extui %0 : i1 to i32
    %c0_i32_0 = arith.constant 0 : i32
    %2 = arith.cmpi ne, %1, %c0_i32_0 : i32
    scf.if %2 {
      %c0_48 = arith.constant 0 : index
      %c0_49 = arith.constant 0 : index
      %c0_50 = arith.constant 0 : index
      %128 = vector.load %arg2[%c0_48, %c0_49, %c0_50] : memref<1x8x32xf32, #tpu.memory_space<vmem>>, vector<1x8x32xf32>
      %129 = vector.shape_cast %128 : vector<1x8x32xf32> to vector<8x32xf32>
      %c0_51 = arith.constant 0 : index
      %c0_52 = arith.constant 0 : index
      %130 = vector.load %arg3[%c0_51, %c0_52] : memref<8x32xf32, #tpu.memory_space<vmem>>, vector<8x32xf32>
      %131 = arith.addf %129, %130 : vector<8x32xf32>
      %c0_53 = arith.constant 0 : index
      %c0_54 = arith.constant 0 : index
      %132 = vector.load %arg12[%c0_53, %c0_54] : memref<8x32xf32, #tpu.memory_space<vmem>>, vector<8x32xf32>
      tpu.vector_store %arg12[%c0_53, %c0_54], %131 {strides = array<i32>} : memref<8x32xf32, #tpu.memory_space<vmem>>, vector<8x32xf32>,
    } else {
    }
    %c0 = arith.constant 0 : index
    %c0_1 = arith.constant 0 : index
    %3 = vector.load %arg12[%c0, %c0_1] : memref<8x32xf32, #tpu.memory_space<vmem>>, vector<8x32xf32>
    %4 = tpu.iota {dimensions = array<i32: 2>} : vector<4x1x32xi32>
    %5 = tpu.iota {dimensions = array<i32: 0>} : vector<4x1x32xi32>
    %c8_i32 = arith.constant 8 : i32
    %6 = vector.broadcast %c8_i32 : i32 to vector<4x1x32xi32>
    %7 = arith.muli %5, %6 : vector<4x1x32xi32>
    %8 = arith.cmpi sge, %4, %7 : vector<4x1x32xi32>
    %c1_i32 = arith.constant 1 : i32
    %9 = vector.broadcast %c1_i32 : i32 to vector<4x1x32xi32>
    %10 = arith.addi %5, %9 : vector<4x1x32xi32>
    %c8_i32_2 = arith.constant 8 : i32
    %11 = vector.broadcast %c8_i32_2 : i32 to vector<4x1x32xi32>
    %12 = arith.muli %10, %11 : vector<4x1x32xi32>
    %13 = arith.cmpi slt, %4, %12 : vector<4x1x32xi32>
    %14 = arith.andi %8, %13 : vector<4x1x32xi1>
    %15 = arith.extui %14 : vector<4x1x32xi1> to vector<4x1x32xi32>
    %16 = arith.sitofp %15 : vector<4x1x32xi32> to vector<4x1x32xf32>
    %cst = arith.constant 0.353553385 : f32
    %17 = vector.broadcast %cst : f32 to vector<4x1x32xf32>
    %18 = arith.mulf %16, %17 : vector<4x1x32xf32>
    %c0_3 = arith.constant 0 : index
    %c0_4 = arith.constant 0 : index
    %c0_5 = arith.constant 0 : index
    %19 = vector.load %arg10[%c0_3, %c0_4, %c0_5] : memref<1x6x32xf32, #tpu.memory_space<vmem>>, vector<1x6x32xf32>
    %20 = vector.shape_cast %19 : vector<1x6x32xf32> to vector<6x32xf32>
    %21 = vector.extract_strided_slice %20 {offsets = [0, 0], sizes = [1, 32], strides = [1, 1]} : vector<6x32xf32> to vector<1x32xf32>
    %22 = vector.extract_strided_slice %20 {offsets = [1, 0], sizes = [1, 32], strides = [1, 1]} : vector<6x32xf32> to vector<1x32xf32>
    %23 = vector.extract_strided_slice %20 {offsets = [2, 0], sizes = [1, 32], strides = [1, 1]} : vector<6x32xf32> to vector<1x32xf32>
    %24 = vector.extract_strided_slice %20 {offsets = [3, 0], sizes = [1, 32], strides = [1, 1]} : vector<6x32xf32> to vector<1x32xf32>
    %25 = vector.extract_strided_slice %20 {offsets = [4, 0], sizes = [1, 32], strides = [1, 1]} : vector<6x32xf32> to vector<1x32xf32>
    %26 = vector.extract_strided_slice %20 {offsets = [5, 0], sizes = [1, 32], strides = [1, 1]} : vector<6x32xf32> to vector<1x32xf32>
    %c0_6 = arith.constant 0 : index
    %c0_7 = arith.constant 0 : index
    %c0_8 = arith.constant 0 : index
    %27 = vector.load %arg4[%c0_6, %c0_7, %c0_8] : memref<1x32x96xf32, #tpu.memory_space<vmem>>, vector<1x32x96xf32>
    %28 = vector.shape_cast %27 : vector<1x32x96xf32> to vector<32x96xf32>
    %cst_9 = arith.constant dense<0.000000e+00> : vector<8x96xf32>
    %29 = tpu.matmul %3, %28, %cst_9 {dimension_numbers = #tpu.dot_dimension_numbers<[1], [0], [0], [1], [0, 0, 1, 1], [], []>} : vector<8x32xf32>, vector<32x96xf32>, vector<8x96xf32> -> vector<8x96xf32>
    %c0_10 = arith.constant 0 : index
    %c0_11 = arith.constant 0 : index
    %c0_12 = arith.constant 0 : index
    %30 = vector.load %arg8[%c0_10, %c0_11, %c0_12] : memref<1x1x96xf32, #tpu.memory_space<vmem>>, vector<1x1x96xf32>
    %31 = vector.shape_cast %30 : vector<1x1x96xf32> to vector<1x96xf32>
    %32 = vector.broadcast %31 : vector<1x96xf32> to vector<8x96xf32>
    %33 = arith.addf %29, %32 : vector<8x96xf32>
    %34 = vector.extract_strided_slice %33 {offsets = [0, 0], sizes = [8, 32], strides = [1, 1]} : vector<8x96xf32> to vector<8x32xf32>
    %35 = vector.extract_strided_slice %33 {offsets = [0, 32], sizes = [8, 32], strides = [1, 1]} : vector<8x96xf32> to vector<8x32xf32>
    %36 = vector.extract_strided_slice %33 {offsets = [0, 64], sizes = [8, 32], strides = [1, 1]} : vector<8x96xf32> to vector<8x32xf32>
    %37 = vector.shape_cast %34 : vector<8x32xf32> to vector<1x8x32xf32>
    %38 = vector.broadcast %37 : vector<1x8x32xf32> to vector<4x8x32xf32>
    %39 = vector.broadcast %18 : vector<4x1x32xf32> to vector<4x8x32xf32>
    %40 = arith.mulf %38, %39 : vector<4x8x32xf32>
    %41 = vector.shape_cast %40 : vector<4x8x32xf32> to vector<32x32xf32>
    %42 = vector.shape_cast %36 : vector<8x32xf32> to vector<1x8x32xf32>
    %43 = vector.broadcast %42 : vector<1x8x32xf32> to vector<4x8x32xf32>
    %44 = vector.broadcast %16 : vector<4x1x32xf32> to vector<4x8x32xf32>
    %45 = arith.mulf %43, %44 : vector<4x8x32xf32>
    %cst_13 = arith.constant dense<0.000000e+00> : vector<32x8xf32>
    %46 = tpu.matmul %41, %35, %cst_13 {dimension_numbers = #tpu.dot_dimension_numbers<[1], [1], [0], [0], [0, 0, 1, 0], [], []>} : vector<32x32xf32>, vector<8x32xf32>, vector<32x8xf32> -> vector<32x8xf32>
    %47 = vector.shape_cast %46 : vector<32x8xf32> to vector<4x8x8xf32>
    %cst_14 = arith.constant dense<0xFF800000> : vector<4x8xf32>
    %48 = vector.multi_reduction <maximumf>, %47, %cst_14 [2] : vector<4x8x8xf32> to vector<4x8xf32>
    %49 = vector.shape_cast %48 : vector<4x8xf32> to vector<4x8x1xf32>
    %50 = vector.broadcast %49 : vector<4x8x1xf32> to vector<4x8x8xf32>
    %51 = arith.subf %47, %50 : vector<4x8x8xf32>
    %52 = math.exp %51 : vector<4x8x8xf32>
    %cst_15 = arith.constant dense<0.000000e+00> : vector<4x8xf32>
    %53 = vector.multi_reduction <add>, %52, %cst_15 [2] : vector<4x8x8xf32> to vector<4x8xf32>
    %54 = vector.shape_cast %53 : vector<4x8xf32> to vector<4x8x1xf32>
    %55 = vector.broadcast %54 : vector<4x8x1xf32> to vector<4x8x8xf32>
    %56 = arith.divf %52, %55 : vector<4x8x8xf32>
    "tpu.trace_start"() <{level = 10 : i32, message = "hqk,hkd->hqd"}> : () -> ()
    %cst_16 = arith.constant dense<0.000000e+00> : vector<4x8x32xf32>
    %57 = tpu.matmul %56, %45, %cst_16 {dimension_numbers = #tpu.dot_dimension_numbers<[2], [1], [1], [2], [0, 0, 0, 1, 1, 2], [0], [0]>} : vector<4x8x8xf32>, vector<4x8x32xf32>, vector<4x8x32xf32> -> vector<4x8x32xf32>
    "tpu.trace_stop"() : () -> ()
    %cst_17 = arith.constant dense<0.000000e+00> : vector<8x32xf32>
    %58 = vector.multi_reduction <add>, %57, %cst_17 [0] : vector<4x8x32xf32> to vector<8x32xf32>
    %c0_18 = arith.constant 0 : index
    %c0_19 = arith.constant 0 : index
    %c0_20 = arith.constant 0 : index
    %59 = vector.load %arg5[%c0_18, %c0_19, %c0_20] : memref<1x32x32xf32, #tpu.memory_space<vmem>>, vector<1x32x32xf32>
    %60 = vector.shape_cast %59 : vector<1x32x32xf32> to vector<32x32xf32>
    %cst_21 = arith.constant dense<0.000000e+00> : vector<8x32xf32>
    %61 = tpu.matmul %58, %60, %cst_21 {dimension_numbers = #tpu.dot_dimension_numbers<[1], [0], [0], [1], [0, 0, 1, 1], [], []>} : vector<8x32xf32>, vector<32x32xf32>, vector<8x32xf32> -> vector<8x32xf32>
    %62 = vector.broadcast %21 : vector<1x32xf32> to vector<8x32xf32>
    %63 = arith.addf %61, %62 : vector<8x32xf32>
    %64 = arith.addf %3, %63 : vector<8x32xf32>
    %cst_22 = arith.constant dense<0.000000e+00> : vector<8xf32>
    %65 = vector.multi_reduction <add>, %64, %cst_22 [1] : vector<8x32xf32> to vector<8xf32>
    %66 = vector.shape_cast %65 : vector<8xf32> to vector<8x1xf32>
    %cst_23 = arith.constant 3.200000e+01 : f32
    %67 = vector.broadcast %cst_23 : f32 to vector<8x1xf32>
    %68 = arith.divf %66, %67 : vector<8x1xf32>
    %69 = vector.broadcast %68 : vector<8x1xf32> to vector<8x32xf32>
    %70 = arith.subf %64, %69 : vector<8x32xf32>
    %71 = arith.mulf %70, %70 : vector<8x32xf32>
    %cst_24 = arith.constant dense<0.000000e+00> : vector<8xf32>
    %72 = vector.multi_reduction <add>, %71, %cst_24 [1] : vector<8x32xf32> to vector<8xf32>
    %73 = vector.shape_cast %72 : vector<8xf32> to vector<8x1xf32>
    %cst_25 = arith.constant 3.200000e+01 : f32
    %74 = vector.broadcast %cst_25 : f32 to vector<8x1xf32>
    %75 = arith.divf %73, %74 : vector<8x1xf32>
    %76 = vector.broadcast %68 : vector<8x1xf32> to vector<8x32xf32>
    %77 = arith.subf %64, %76 : vector<8x32xf32>
    %cst_26 = arith.constant 9.99999974E-6 : f32
    %78 = vector.broadcast %cst_26 : f32 to vector<8x1xf32>
    %79 = arith.addf %75, %78 : vector<8x1xf32>
    %80 = math.rsqrt %79 : vector<8x1xf32>
    %81 = vector.broadcast %80 : vector<8x1xf32> to vector<8x32xf32>
    %82 = arith.mulf %77, %81 : vector<8x32xf32>
    %83 = vector.broadcast %22 : vector<1x32xf32> to vector<8x32xf32>
    %84 = arith.mulf %82, %83 : vector<8x32xf32>
    %85 = vector.broadcast %23 : vector<1x32xf32> to vector<8x32xf32>
    %86 = arith.addf %84, %85 : vector<8x32xf32>
    %c0_27 = arith.constant 0 : index
    %c0_28 = arith.constant 0 : index
    %c0_29 = arith.constant 0 : index
    %87 = vector.load %arg6[%c0_27, %c0_28, %c0_29] : memref<1x32x64xf32, #tpu.memory_space<vmem>>, vector<1x32x64xf32>
    %88 = vector.shape_cast %87 : vector<1x32x64xf32> to vector<32x64xf32>
    %cst_30 = arith.constant dense<0.000000e+00> : vector<8x64xf32>
    %89 = tpu.matmul %86, %88, %cst_30 {dimension_numbers = #tpu.dot_dimension_numbers<[1], [0], [0], [1], [0, 0, 1, 1], [], []>} : vector<8x32xf32>, vector<32x64xf32>, vector<8x64xf32> -> vector<8x64xf32>
    %c0_31 = arith.constant 0 : index
    %c0_32 = arith.constant 0 : index
    %c0_33 = arith.constant 0 : index
    %90 = vector.load %arg9[%c0_31, %c0_32, %c0_33] : memref<1x1x64xf32, #tpu.memory_space<vmem>>, vector<1x1x64xf32>
    %91 = vector.shape_cast %90 : vector<1x1x64xf32> to vector<1x64xf32>
    %92 = vector.broadcast %91 : vector<1x64xf32> to vector<8x64xf32>
    %93 = arith.addf %89, %92 : vector<8x64xf32>
    %cst_34 = arith.constant 0.000000e+00 : f32
    %94 = vector.broadcast %cst_34 : f32 to vector<8x64xf32>
    %95 = arith.maximumf %93, %94 : vector<8x64xf32>
    %c0_35 = arith.constant 0 : index
    %c0_36 = arith.constant 0 : index
    %c0_37 = arith.constant 0 : index
    %96 = vector.load %arg7[%c0_35, %c0_36, %c0_37] : memref<1x64x32xf32, #tpu.memory_space<vmem>>, vector<1x64x32xf32>
    %97 = vector.shape_cast %96 : vector<1x64x32xf32> to vector<64x32xf32>
    %cst_38 = arith.constant dense<0.000000e+00> : vector<8x32xf32>
    %98 = tpu.matmul %95, %97, %cst_38 {dimension_numbers = #tpu.dot_dimension_numbers<[1], [0], [0], [1], [0, 0, 1, 1], [], []>} : vector<8x64xf32>, vector<64x32xf32>, vector<8x32xf32> -> vector<8x32xf32>
    %99 = vector.broadcast %24 : vector<1x32xf32> to vector<8x32xf32>
    %100 = arith.addf %98, %99 : vector<8x32xf32>
    %101 = arith.addf %86, %100 : vector<8x32xf32>
    %cst_39 = arith.constant dense<0.000000e+00> : vector<8xf32>
    %102 = vector.multi_reduction <add>, %101, %cst_39 [1] : vector<8x32xf32> to vector<8xf32>
    %103 = vector.shape_cast %102 : vector<8xf32> to vector<8x1xf32>
    %cst_40 = arith.constant 3.200000e+01 : f32
    %104 = vector.broadcast %cst_40 : f32 to vector<8x1xf32>
    %105 = arith.divf %103, %104 : vector<8x1xf32>
    %106 = vector.broadcast %105 : vector<8x1xf32> to vector<8x32xf32>
    %107 = arith.subf %101, %106 : vector<8x32xf32>
    %108 = arith.mulf %107, %107 : vector<8x32xf32>
    %cst_41 = arith.constant dense<0.000000e+00> : vector<8xf32>
    %109 = vector.multi_reduction <add>, %108, %cst_41 [1] : vector<8x32xf32> to vector<8xf32>
    %110 = vector.shape_cast %109 : vector<8xf32> to vector<8x1xf32>
    %cst_42 = arith.constant 3.200000e+01 : f32
    %111 = vector.broadcast %cst_42 : f32 to vector<8x1xf32>
    %112 = arith.divf %110, %111 : vector<8x1xf32>
    %113 = vector.broadcast %105 : vector<8x1xf32> to vector<8x32xf32>
    %114 = arith.subf %101, %113 : vector<8x32xf32>
    %cst_43 = arith.constant 9.99999974E-6 : f32
    %115 = vector.broadcast %cst_43 : f32 to vector<8x1xf32>
    %116 = arith.addf %112, %115 : vector<8x1xf32>
    %117 = math.rsqrt %116 : vector<8x1xf32>
    %118 = vector.broadcast %117 : vector<8x1xf32> to vector<8x32xf32>
    %119 = arith.mulf %114, %118 : vector<8x32xf32>
    %120 = vector.broadcast %25 : vector<1x32xf32> to vector<8x32xf32>
    %121 = arith.mulf %119, %120 : vector<8x32xf32>
    %122 = vector.broadcast %26 : vector<1x32xf32> to vector<8x32xf32>
    %123 = arith.addf %121, %122 : vector<8x32xf32>
    %c0_44 = arith.constant 0 : index
    %c0_45 = arith.constant 0 : index
    %124 = vector.load %arg12[%c0_44, %c0_45] : memref<8x32xf32, #tpu.memory_space<vmem>>, vector<8x32xf32>
    tpu.vector_store %arg12[%c0_44, %c0_45], %123 {strides = array<i32>} : memref<8x32xf32, #tpu.memory_space<vmem>>, vector<8x32xf32>,
    %c1_i32_46 = arith.constant 1 : i32
    %125 = arith.cmpi eq, %arg1, %c1_i32_46 : i32
    %126 = arith.extui %125 : i1 to i32
    %c0_i32_47 = arith.constant 0 : i32
    %127 = arith.cmpi ne, %126, %c0_i32_47 : i32
    scf.if %127 {
      %c0_48 = arith.constant 0 : index
      %c0_49 = arith.constant 0 : index
      %c0_50 = arith.constant 0 : index
      %128 = vector.load %arg11[%c0_48, %c0_49, %c0_50] : memref<1x8x32xf32, #tpu.memory_space<vmem>>, vector<1x8x32xf32>
      %129 = vector.shape_cast %128 : vector<1x8x32xf32> to vector<8x32xf32>
      %130 = vector.shape_cast %123 : vector<8x32xf32> to vector<1x8x32xf32>
      tpu.vector_store %arg11[%c0_48, %c0_49, %c0_50], %130 {strides = array<i32>} : memref<1x8x32xf32, #tpu.memory_space<vmem>>, vector<1x8x32xf32>,
    } else {
    }
    return
  }
  func.func @transform_0(%arg0: i32, %arg1: i32) -> (i32, i32, i32) {
    %c0_i32 = arith.constant 0 : i32
    %c0_i32_0 = arith.constant 0 : i32
    %c0_i32_1 = arith.constant 0 : i32
    return %arg0, %c0_i32, %c0_i32_0 : i32, i32, i32
  }
  func.func @transform_1(%arg0: i32, %arg1: i32) -> (i32, i32) {
    %c0_i32 = arith.constant 0 : i32
    %c0_i32_0 = arith.constant 0 : i32
    %c0_i32_1 = arith.constant 0 : i32
    return %c0_i32, %c0_i32_0 : i32, i32
  }
  func.func @transform_2(%arg0: i32, %arg1: i32) -> (i32, i32, i32) {
    %c0_i32 = arith.constant 0 : i32
    %c0_i32_0 = arith.constant 0 : i32
    %c0_i32_1 = arith.constant 0 : i32
    return %arg1, %c0_i32, %c0_i32_0 : i32, i32, i32
  }
  func.func @transform_3(%arg0: i32, %arg1: i32) -> (i32, i32, i32) {
    %c0_i32 = arith.constant 0 : i32
    %c0_i32_0 = arith.constant 0 : i32
    %c0_i32_1 = arith.constant 0 : i32
    return %arg1, %c0_i32, %c0_i32_0 : i32, i32, i32
  }
  func.func @transform_4(%arg0: i32, %arg1: i32) -> (i32, i32, i32) {
    %c0_i32 = arith.constant 0 : i32
    %c0_i32_0 = arith.constant 0 : i32
    %c0_i32_1 = arith.constant 0 : i32
    return %arg1, %c0_i32, %c0_i32_0 : i32, i32, i32
  }
  func.func @transform_5(%arg0: i32, %arg1: i32) -> (i32, i32, i32) {
    %c0_i32 = arith.constant 0 : i32
    %c0_i32_0 = arith.constant 0 : i32
    %c0_i32_1 = arith.constant 0 : i32
    return %arg1, %c0_i32, %c0_i32_0 : i32, i32, i32
  }
  func.func @transform_6(%arg0: i32, %arg1: i32) -> (i32, i32, i32) {
    %c0_i32 = arith.constant 0 : i32
    %c0_i32_0 = arith.constant 0 : i32
    %c0_i32_1 = arith.constant 0 : i32
    return %arg1, %c0_i32, %c0_i32_0 : i32, i32, i32
  }
  func.func @transform_7(%arg0: i32, %arg1: i32) -> (i32, i32, i32) {
    %c0_i32 = arith.constant 0 : i32
    %c0_i32_0 = arith.constant 0 : i32
    %c0_i32_1 = arith.constant 0 : i32
    return %arg1, %c0_i32, %c0_i32_0 : i32, i32, i32
  }
  func.func @transform_8(%arg0: i32, %arg1: i32) -> (i32, i32, i32) {
    %c0_i32 = arith.constant 0 : i32
    %c0_i32_0 = arith.constant 0 : i32
    %c0_i32_1 = arith.constant 0 : i32
    return %arg1, %c0_i32, %c0_i32_0 : i32, i32, i32
  }
  func.func @transform_9(%arg0: i32, %arg1: i32) -> (i32, i32, i32) {
    %c0_i32 = arith.constant 0 : i32
    %c0_i32_0 = arith.constant 0 : i32
    %c0_i32_1 = arith.constant 0 : i32
    return %arg0, %c0_i32, %c0_i32_0 : i32, i32, i32
  }
}

</mosaic_0001>

<llo_original>
// kernel: tpu_custom_call.1
$region0: #{tpu_custom_call.1}
  #allocation0 [shape = 'u32[]', space=smem, size = 0x4, offset = 0x4, fixed_abs, tag = 'smem constant byte address 0x4 - core index']
  #allocation1 [shape = 'u32[144,128]{1,0:T(1,128)}', space=vmem, size = 0x12000, scoped, tag = 'internal scratch']
  #allocation2 [shape = 'f32[8,32]{1,0:T(8,128)}', space=vmem, size = 0x1000, scoped, tag = 'scratch operand']
  %s0 = inlined_call_operand.vmem [shape: f32[2,8,32], index: 0, kind: input, shape index: {}]
  %s1 = inlined_call_operand.vmem [shape: f32[8,32], index: 1, kind: input, shape index: {}]
  %s2 = inlined_call_operand.vmem [shape: f32[2,32,96], index: 2, kind: input, shape index: {}]
  %s3 = inlined_call_operand.vmem [shape: f32[2,32,32], index: 3, kind: input, shape index: {}]
  %s4 = inlined_call_operand.vmem [shape: f32[2,32,64], index: 4, kind: input, shape index: {}]
  %s5 = inlined_call_operand.vmem [shape: f32[2,64,32], index: 5, kind: input, shape index: {}]
  %s6 = inlined_call_operand.vmem [shape: f32[2,1,96], index: 6, kind: input, shape index: {}]
  %s7 = inlined_call_operand.vmem [shape: f32[2,1,64], index: 7, kind: input, shape index: {}]
  %s8 = inlined_call_operand.vmem [shape: f32[2,6,32], index: 8, kind: input, shape index: {}]
  %s9 = inlined_call_operand.hbm [shape: f32[2,8,32], index: 9, kind: output, shape index: {}]
  %s10 = sld [smem:[#allocation0]]
  $region77: #{tpu_custom_call.1} parent=0
    _
  %s12 = ssub.s32 1, %s10
  %s13 = scalar_select 0, %s12, %s10
  $region1: #{tpu_custom_call.1} parent=0
    #allocation3 [shape = 'u8[8192]{0}', space=vmem, size = 0x2000, scoped, tag = 'output window, operand 0']
    #allocation4 [shape = 's32[2]{0}', space=sflag, size = 0x8, scoped, tag = 'scoped memory for tpu_custom_call.1']
    %14 = vsyncpa [#allocation4], 0
    %s15 = scalar_lea.sflag [#allocation4], 1
    %16 = vsyncpa %s15, 0
    loop: start=0, step=1, limit=6
    $region2: #{tpu_custom_call.1} parent=1 // loop_pre_header
      _
    $region3: #{tpu_custom_call.1} parent=1 // loop_header
      %s18 = sphi 0, %s22
      %p19 = scmp.ge.s32.totalorder %s18, 6
      %s25 = sphi 0, %s37
      %s26 = sphi 0, %s33
      %s27 = sphi 0, %s25
      %s28 = sphi 0, %s26
      %s29 = sphi 0, %s27
      %s30 = sphi 0, %s28
      %s40 = sphi 0, %s42
      %s43 = sphi 0, %s40
      %s44 = sphi 0, %s43
      %s60 = sphi 0, %s44
      %s64 = sphi 0, %s64
      %s66 = sphi 0, %s64
      %s67 = sphi 0, %s66
      %s81 = sphi 0, %s67
      %s87 = sphi 0, %s89
      %s90 = sphi 0, %s87
      %s91 = sphi 0, %s90
      %s107 = sphi 0, %s91
      %s113 = sphi 0, %s115
      %s116 = sphi 0, %s113
      %s117 = sphi 0, %s116
      %s133 = sphi 0, %s117
      %s139 = sphi 0, %s141
      %s142 = sphi 0, %s139
      %s143 = sphi 0, %s142
      %s159 = sphi 0, %s143
      %s165 = sphi 0, %s167
      %s168 = sphi 0, %s165
      %s169 = sphi 0, %s168
      %s185 = sphi 0, %s169
      %s191 = sphi 0, %s193
      %s194 = sphi 0, %s191
      %s195 = sphi 0, %s194
      %s211 = sphi 0, %s195
      %s217 = sphi 0, %s219
      %s220 = sphi 0, %s217
      %s221 = sphi 0, %s220
      %s237 = sphi 0, %s221
      %s243 = sphi 0, %s245
      %s246 = sphi 0, %s243
      %s247 = sphi 0, %s246
      %s263 = sphi 0, %s247
      %s269 = sphi 0, %s271
      %s272 = sphi 0, %s269
      %s273 = sphi 0, %s272
      %s289 = sphi 0, %s273
    $region4: #{tpu_custom_call.1} parent=1 // loop_header_branch
      %21 = sbr.rel (%p19) target = $region8
    $region5: #{tpu_custom_call.1} parent=1 // loop_body
      %s23 = ssub.s32 %s18, 1
      %s24 = ssub.s32 %s18, 2
      %s31 = sadd.s32 1, %s26
      %p32 = scmp.ge.s32.totalorder %s31, 2
      %s33 = scalar_select %p32, 0, %s31
      %s34 = sadd.s32 1, %s25
      %s35 = scalar_select %p32, %s34, %s25
      %p36 = scmp.ge.s32.totalorder %s35, 2
      %s37 = scalar_select %p36, 0, %s35
      %s38 = ssub.s32 %s25, %s37
      %p39 = scmp.eq.s32.totalorder %s38, 0
      %s41 = sadd.s32 %s40, 1
      %s42 = scalar_select %p39, %s40, %s41
      %p45 = pneg %p39
      %p46 = scmp.eq.s32.totalorder %s18, 3
      %p47 = por %p45, %p46
      %p48 = scmp.ne.s32.totalorder %s40, %s43
      %p49 = scmp.eq.s32.totalorder %s18, 0
      %p50 = por %p48, %p49
      %p51 = scmp.ne.s32.totalorder %s40, %s43
      %p52 = scmp.eq.s32.totalorder %s23, 3
      %p53 = por %p51, %p52
      %p54 = scmp.ne.s32.totalorder %s43, %s44
      %p55 = scmp.eq.s32.totalorder %s23, 0
      %p56 = por %p54, %p55
      %p57 = scmp.ne.s32.totalorder %s43, %s44
      %p58 = scmp.eq.s32.totalorder %s24, 3
      %p59 = por %p57, %p58
      %p61 = scmp.ne.s32.totalorder %s44, %s60
      %p62 = scmp.eq.s32.totalorder %s24, 0
      %p63 = por %p61, %p62
      %s65 = sadd.s32 %s64, 1
      %p68 = scmp.eq.s32.totalorder %s18, 3
      %p69 = scmp.ne.s32.totalorder %s64, %s66
      %p70 = scmp.eq.s32.totalorder %s18, 0
      %p71 = por %p69, %p70
      %p72 = scmp.ne.s32.totalorder %s64, %s66
      %p73 = scmp.eq.s32.totalorder %s23, 3
      %p74 = por %p72, %p73
      %p75 = scmp.ne.s32.totalorder %s66, %s67
      %p76 = scmp.eq.s32.totalorder %s23, 0
      %p77 = por %p75, %p76
      %p78 = scmp.ne.s32.totalorder %s66, %s67
      %p79 = scmp.eq.s32.totalorder %s24, 3
      %p80 = por %p78, %p79
      %p82 = scmp.ne.s32.totalorder %s67, %s81
      %p83 = scmp.eq.s32.totalorder %s24, 0
      %p84 = por %p82, %p83
      %s85 = ssub.s32 %s26, %s33
      %p86 = scmp.eq.s32.totalorder %s85, 0
      %s88 = sadd.s32 %s87, 1
      %s89 = scalar_select %p86, %s87, %s88
      %p92 = pneg %p86
      %p93 = scmp.eq.s32.totalorder %s18, 3
      %p94 = por %p92, %p93
      %p95 = scmp.ne.s32.totalorder %s87, %s90
      %p96 = scmp.eq.s32.totalorder %s18, 0
      %p97 = por %p95, %p96
      %p98 = scmp.ne.s32.totalorder %s87, %s90
      %p99 = scmp.eq.s32.totalorder %s23, 3
      %p100 = por %p98, %p99
      %p101 = scmp.ne.s32.totalorder %s90, %s91
      %p102 = scmp.eq.s32.totalorder %s23, 0
      %p103 = por %p101, %p102
      %p104 = scmp.ne.s32.totalorder %s90, %s91
      %p105 = scmp.eq.s32.totalorder %s24, 3
      %p106 = por %p104, %p105
      %p108 = scmp.ne.s32.totalorder %s91, %s107
      %p109 = scmp.eq.s32.totalorder %s24, 0
      %p110 = por %p108, %p109
      %s111 = ssub.s32 %s26, %s33
      %p112 = scmp.eq.s32.totalorder %s111, 0
      %s114 = sadd.s32 %s113, 1
      %s115 = scalar_select %p112, %s113, %s114
      %p118 = pneg %p112
      %p119 = scmp.eq.s32.totalorder %s18, 3
      %p120 = por %p118, %p119
      %p121 = scmp.ne.s32.totalorder %s113, %s116
      %p122 = scmp.eq.s32.totalorder %s18, 0
      %p123 = por %p121, %p122
      %p124 = scmp.ne.s32.totalorder %s113, %s116
      %p125 = scmp.eq.s32.totalorder %s23, 3
      %p126 = por %p124, %p125
      %p127 = scmp.ne.s32.totalorder %s116, %s117
      %p128 = scmp.eq.s32.totalorder %s23, 0
      %p129 = por %p127, %p128
      %p130 = scmp.ne.s32.totalorder %s116, %s117
      %p131 = scmp.eq.s32.totalorder %s24, 3
      %p132 = por %p130, %p131
      %p134 = scmp.ne.s32.totalorder %s117, %s133
      %p135 = scmp.eq.s32.totalorder %s24, 0
      %p136 = por %p134, %p135
      %s137 = ssub.s32 %s26, %s33
      %p138 = scmp.eq.s32.totalorder %s137, 0
      %s140 = sadd.s32 %s139, 1
      %s141 = scalar_select %p138, %s139, %s140
      %p144 = pneg %p138
      %p145 = scmp.eq.s32.totalorder %s18, 3
      %p146 = por %p144, %p145
      %p147 = scmp.ne.s32.totalorder %s139, %s142
      %p148 = scmp.eq.s32.totalorder %s18, 0
      %p149 = por %p147, %p148
      %p150 = scmp.ne.s32.totalorder %s139, %s142
      %p151 = scmp.eq.s32.totalorder %s23, 3
      %p152 = por %p150, %p151
      %p153 = scmp.ne.s32.totalorder %s142, %s143
      %p154 = scmp.eq.s32.totalorder %s23, 0
      %p155 = por %p153, %p154
      %p156 = scmp.ne.s32.totalorder %s142, %s143
      %p157 = scmp.eq.s32.totalorder %s24, 3
      %p158 = por %p156, %p157
      %p160 = scmp.ne.s32.totalorder %s143, %s159
      %p161 = scmp.eq.s32.totalorder %s24, 0
      %p162 = por %p160, %p161
      %s163 = ssub.s32 %s26, %s33
      %p164 = scmp.eq.s32.totalorder %s163, 0
      %s166 = sadd.s32 %s165, 1
      %s167 = scalar_select %p164, %s165, %s166
      %p170 = pneg %p164
      %p171 = scmp.eq.s32.totalorder %s18, 3
      %p172 = por %p170, %p171
      %p173 = scmp.ne.s32.totalorder %s165, %s168
      %p174 = scmp.eq.s32.totalorder %s18, 0
      %p175 = por %p173, %p174
      %p176 = scmp.ne.s32.totalorder %s165, %s168
      %p177 = scmp.eq.s32.totalorder %s23, 3
      %p178 = por %p176, %p177
      %p179 = scmp.ne.s32.totalorder %s168, %s169
      %p180 = scmp.eq.s32.totalorder %s23, 0
      %p181 = por %p179, %p180
      %p182 = scmp.ne.s32.totalorder %s168, %s169
      %p183 = scmp.eq.s32.totalorder %s24, 3
      %p184 = por %p182, %p183
      %p186 = scmp.ne.s32.totalorder %s169, %s185
      %p187 = scmp.eq.s32.totalorder %s24, 0
      %p188 = por %p186, %p187
      %s189 = ssub.s32 %s26, %s33
      %p190 = scmp.eq.s32.totalorder %s189, 0
      %s192 = sadd.s32 %s191, 1
      %s193 = scalar_select %p190, %s191, %s192
      %p196 = pneg %p190
      %p197 = scmp.eq.s32.totalorder %s18, 3
      %p198 = por %p196, %p197
      %p199 = scmp.ne.s32.totalorder %s191, %s194
      %p200 = scmp.eq.s32.totalorder %s18, 0
      %p201 = por %p199, %p200
      %p202 = scmp.ne.s32.totalorder %s191, %s194
      %p203 = scmp.eq.s32.totalorder %s23, 3
      %p204 = por %p202, %p203
      %p205 = scmp.ne.s32.totalorder %s194, %s195
      %p206 = scmp.eq.s32.totalorder %s23, 0
      %p207 = por %p205, %p206
      %p208 = scmp.ne.s32.totalorder %s194, %s195
      %p209 = scmp.eq.s32.totalorder %s24, 3
      %p210 = por %p208, %p209
      %p212 = scmp.ne.s32.totalorder %s195, %s211
      %p213 = scmp.eq.s32.totalorder %s24, 0
      %p214 = por %p212, %p213
      %s215 = ssub.s32 %s26, %s33
      %p216 = scmp.eq.s32.totalorder %s215, 0
      %s218 = sadd.s32 %s217, 1
      %s219 = scalar_select %p216, %s217, %s218
      %p222 = pneg %p216
      %p223 = scmp.eq.s32.totalorder %s18, 3
      %p224 = por %p222, %p223
      %p225 = scmp.ne.s32.totalorder %s217, %s220
      %p226 = scmp.eq.s32.totalorder %s18, 0
      %p227 = por %p225, %p226
      %p228 = scmp.ne.s32.totalorder %s217, %s220
      %p229 = scmp.eq.s32.totalorder %s23, 3
      %p230 = por %p228, %p229
      %p231 = scmp.ne.s32.totalorder %s220, %s221
      %p232 = scmp.eq.s32.totalorder %s23, 0
      %p233 = por %p231, %p232
      %p234 = scmp.ne.s32.totalorder %s220, %s221
      %p235 = scmp.eq.s32.totalorder %s24, 3
      %p236 = por %p234, %p235
      %p238 = scmp.ne.s32.totalorder %s221, %s237
      %p239 = scmp.eq.s32.totalorder %s24, 0
      %p240 = por %p238, %p239
      %s241 = ssub.s32 %s26, %s33
      %p242 = scmp.eq.s32.totalorder %s241, 0
      %s244 = sadd.s32 %s243, 1
      %s245 = scalar_select %p242, %s243, %s244
      %p248 = pneg %p242
      %p249 = scmp.eq.s32.totalorder %s18, 3
      %p250 = por %p248, %p249
      %p251 = scmp.ne.s32.totalorder %s243, %s246
      %p252 = scmp.eq.s32.totalorder %s18, 0
      %p253 = por %p251, %p252
      %p254 = scmp.ne.s32.totalorder %s243, %s246
      %p255 = scmp.eq.s32.totalorder %s23, 3
      %p256 = por %p254, %p255
      %p257 = scmp.ne.s32.totalorder %s246, %s247
      %p258 = scmp.eq.s32.totalorder %s23, 0
      %p259 = por %p257, %p258
      %p260 = scmp.ne.s32.totalorder %s246, %s247
      %p261 = scmp.eq.s32.totalorder %s24, 3
      %p262 = por %p260, %p261
      %p264 = scmp.ne.s32.totalorder %s247, %s263
      %p265 = scmp.eq.s32.totalorder %s24, 0
      %p266 = por %p264, %p265
      %s267 = ssub.s32 %s25, %s37
      %p268 = scmp.eq.s32.totalorder %s267, 0
      %s270 = sadd.s32 %s269, 1
      %s271 = scalar_select %p268, %s269, %s270
      %p274 = pneg %p268
      %p275 = scmp.eq.s32.totalorder %s18, 3
      %p276 = por %p274, %p275
      %p277 = scmp.ne.s32.totalorder %s269, %s272
      %p278 = scmp.eq.s32.totalorder %s18, 0
      %p279 = por %p277, %p278
      %p280 = scmp.ne.s32.totalorder %s269, %s272
      %p281 = scmp.eq.s32.totalorder %s23, 3
      %p282 = por %p280, %p281
      %p283 = scmp.ne.s32.totalorder %s272, %s273
      %p284 = scmp.eq.s32.totalorder %s23, 0
      %p285 = por %p283, %p284
      %p286 = scmp.ne.s32.totalorder %s272, %s273
      %p287 = scmp.eq.s32.totalorder %s24, 3
      %p288 = por %p286, %p287
      %p290 = scmp.ne.s32.totalorder %s273, %s289
      %p291 = scmp.eq.s32.totalorder %s24, 0
      %p292 = por %p290, %p291
      %p293 = scmp.le.s32.totalorder 1, %s18
      %p294 = scmp.lt.s32.totalorder %s18, 5
      %p295 = pnand %p293, %p294
      %p296 = pneg %p295
      // Predicated region
      $region9: #{tpu_custom_call.1} parent=5 // pred_check
        _
      $region10: #{tpu_custom_call.1} parent=5 // pred_check_branch
        %298 = sbr.rel (%p295) target = $region12
      $region11: #{tpu_custom_call.1} parent=5 // pred_region
        %s299 = ssub.s32 %s18, 1
        // Predicated region
        $region13: #{tpu_custom_call.1} parent=11 // pred_check
          %p300 = pneg %p77
        $region14: #{tpu_custom_call.1} parent=11 // pred_check_branch
          %302 = sbr.rel (%p300) target = $region16
        $region15: #{tpu_custom_call.1} parent=11 // pred_region
          _
        $region16: #{tpu_custom_call.1} parent=11 // pred_fallthru
          _
      $region12: #{tpu_custom_call.1} parent=5 // pred_fallthru
        _
      %p303 = scmp.lt.s32.totalorder %s18, 4
      // Predicated region
      $region17: #{tpu_custom_call.1} parent=5 // pred_check
        %p304 = pneg %p303
      $region18: #{tpu_custom_call.1} parent=5 // pred_check_branch
        %306 = sbr.rel (%p304) target = $region20
      $region19: #{tpu_custom_call.1} parent=5 // pred_region
        // Predicated region
        $region21: #{tpu_custom_call.1} parent=19 // pred_check
          %p307 = pneg %p50
        $region22: #{tpu_custom_call.1} parent=19 // pred_check_branch
          %309 = sbr.rel (%p307) target = $region24
        $region23: #{tpu_custom_call.1} parent=19 // pred_region
          %p310 = scmp.lt.s32.totalorder %s25, 1
          %s311 = scalar_select %p310, %s25, 1
          %s312 = smul.addr %s311, 8
          %s313 = scalar_lea.vmem %s0, %s312
        $region24: #{tpu_custom_call.1} parent=19 // pred_fallthru
          _
        // Predicated region
        $region25: #{tpu_custom_call.1} parent=19 // pred_check
          %p314 = pneg %p97
        $region26: #{tpu_custom_call.1} parent=19 // pred_check_branch
          %316 = sbr.rel (%p314) target = $region28
        $region27: #{tpu_custom_call.1} parent=19 // pred_region
          %p317 = scmp.lt.s32.totalorder %s26, 1
          %s318 = scalar_select %p317, %s26, 1
          %s319 = smul.addr %s318, 4
          %s320 = smul.addr %s319, 8
          %s321 = scalar_lea.vmem %s2, %s320
        $region28: #{tpu_custom_call.1} parent=19 // pred_fallthru
          _
        // Predicated region
        $region29: #{tpu_custom_call.1} parent=19 // pred_check
          %p322 = pneg %p123
        $region30: #{tpu_custom_call.1} parent=19 // pred_check_branch
          %324 = sbr.rel (%p322) target = $region32
        $region31: #{tpu_custom_call.1} parent=19 // pred_region
          %p325 = scmp.lt.s32.totalorder %s26, 1
          %s326 = scalar_select %p325, %s26, 1
          %s327 = smul.addr %s326, 4
          %s328 = smul.addr %s327, 8
          %s329 = scalar_lea.vmem %s3, %s328
        $region32: #{tpu_custom_call.1} parent=19 // pred_fallthru
          _
        // Predicated region
        $region33: #{tpu_custom_call.1} parent=19 // pred_check
          %p330 = pneg %p149
        $region34: #{tpu_custom_call.1} parent=19 // pred_check_branch
          %332 = sbr.rel (%p330) target = $region36
        $region35: #{tpu_custom_call.1} parent=19 // pred_region
          %p333 = scmp.lt.s32.totalorder %s26, 1
          %s334 = scalar_select %p333, %s26, 1
          %s335 = smul.addr %s334, 4
          %s336 = smul.addr %s335, 8
          %s337 = scalar_lea.vmem %s4, %s336
        $region36: #{tpu_custom_call.1} parent=19 // pred_fallthru
          _
        // Predicated region
        $region37: #{tpu_custom_call.1} parent=19 // pred_check
          %p338 = pneg %p175
        $region38: #{tpu_custom_call.1} parent=19 // pred_check_branch
          %340 = sbr.rel (%p338) target = $region40
        $region39: #{tpu_custom_call.1} parent=19 // pred_region
          %p341 = scmp.lt.s32.totalorder %s26, 1
          %s342 = scalar_select %p341, %s26, 1
          %s343 = smul.addr %s342, 8
          %s344 = smul.addr %s343, 8
          %s345 = scalar_lea.vmem %s5, %s344
        $region40: #{tpu_custom_call.1} parent=19 // pred_fallthru
          _
        // Predicated region
        $region41: #{tpu_custom_call.1} parent=19 // pred_check
          %p346 = pneg %p201
        $region42: #{tpu_custom_call.1} parent=19 // pred_check_branch
          %348 = sbr.rel (%p346) target = $region44
        $region43: #{tpu_custom_call.1} parent=19 // pred_region
          %p349 = scmp.lt.s32.totalorder %s26, 1
          %s350 = scalar_select %p349, %s26, 1
          %s351 = scalar_lea.vmem %s6, %s350
        $region44: #{tpu_custom_call.1} parent=19 // pred_fallthru
          _
        // Predicated region
        $region45: #{tpu_custom_call.1} parent=19 // pred_check
          %p352 = pneg %p227
        $region46: #{tpu_custom_call.1} parent=19 // pred_check_branch
          %354 = sbr.rel (%p352) target = $region48
        $region47: #{tpu_custom_call.1} parent=19 // pred_region
          %p355 = scmp.lt.s32.totalorder %s26, 1
          %s356 = scalar_select %p355, %s26, 1
          %s357 = scalar_lea.vmem %s7, %s356
        $region48: #{tpu_custom_call.1} parent=19 // pred_fallthru
          _
        // Predicated region
        $region49: #{tpu_custom_call.1} parent=19 // pred_check
          %p358 = pneg %p253
        $region50: #{tpu_custom_call.1} parent=19 // pred_check_branch
          %360 = sbr.rel (%p358) target = $region52
        $region51: #{tpu_custom_call.1} parent=19 // pred_region
          %p361 = scmp.lt.s32.totalorder %s26, 1
          %s362 = scalar_select %p361, %s26, 1
          %s363 = smul.addr %s362, 8
          %s364 = scalar_lea.vmem %s8, %s363
        $region52: #{tpu_custom_call.1} parent=19 // pred_fallthru
          _
      $region20: #{tpu_custom_call.1} parent=5 // pred_fallthru
        _
      %p365 = scmp.le.s32.totalorder 1, %s18
      %p366 = scmp.lt.s32.totalorder %s18, 5
      %p367 = pnand %p365, %p366
      %p368 = pneg %p367
      // Predicated region
      $region53: #{tpu_custom_call.1} parent=5 // pred_check
        _
      $region54: #{tpu_custom_call.1} parent=5 // pred_check_branch
        %370 = sbr.rel (%p367) target = $region56
      $region55: #{tpu_custom_call.1} parent=5 // pred_region
        %s371 = ssub.s32 %s18, 1
        %p372 = scmp.lt.s32.totalorder %s27, 1
        %s373 = scalar_select %p372, %s27, 1
        %s374 = smul.addr %s373, 8
        %s375 = scalar_lea.vmem %s0, %s374
        %p376 = pneg %p56
        %p377 = pneg %p53
        %p378 = pneg %p77
        %p379 = pneg %p74
        %p380 = scmp.lt.s32.totalorder %s28, 1
        %s381 = scalar_select %p380, %s28, 1
        %s382 = smul.addr %s381, 4
        %s383 = smul.addr %s382, 8
        %s384 = scalar_lea.vmem %s2, %s383
        %p385 = pneg %p103
        %p386 = pneg %p100
        %p387 = scmp.lt.s32.totalorder %s28, 1
        %s388 = scalar_select %p387, %s28, 1
        %s389 = smul.addr %s388, 4
        %s390 = smul.addr %s389, 8
        %s391 = scalar_lea.vmem %s3, %s390
        %p392 = pneg %p129
        %p393 = pneg %p126
        %p394 = scmp.lt.s32.totalorder %s28, 1
        %s395 = scalar_select %p394, %s28, 1
        %s396 = smul.addr %s395, 4
        %s397 = smul.addr %s396, 8
        %s398 = scalar_lea.vmem %s4, %s397
        %p399 = pneg %p155
        %p400 = pneg %p152
        %p401 = scmp.lt.s32.totalorder %s28, 1
        %s402 = scalar_select %p401, %s28, 1
        %s403 = smul.addr %s402, 8
        %s404 = smul.addr %s403, 8
        %s405 = scalar_lea.vmem %s5, %s404
        %p406 = pneg %p181
        %p407 = pneg %p178
        %p408 = scmp.lt.s32.totalorder %s28, 1
        %s409 = scalar_select %p408, %s28, 1
        %s410 = scalar_lea.vmem %s6, %s409
        %p411 = pneg %p207
        %p412 = pneg %p204
        %p413 = scmp.lt.s32.totalorder %s28, 1
        %s414 = scalar_select %p413, %s28, 1
        %s415 = scalar_lea.vmem %s7, %s414
        %p416 = pneg %p233
        %p417 = pneg %p230
        %p418 = scmp.lt.s32.totalorder %s28, 1
        %s419 = scalar_select %p418, %s28, 1
        %s420 = smul.addr %s419, 8
        %s421 = scalar_lea.vmem %s8, %s420
        %p422 = pneg %p259
        %p423 = pneg %p256
        %p424 = pneg %p285
        %p425 = pneg %p282
        %s426 = sand.u32 %s272, 1
        %s427 = scalar_lea.sflag [#allocation4], %s426
        %s428 = sand.u32 %s272, 1
        %s429 = smul.addr %s428, 8
        %s430 = scalar_lea.vmem [#allocation3], %s429
        %p431 = scmp.lt.s32.totalorder %s27, 1
        %s432 = scalar_select %p431, %s27, 1
        %s433 = smul.addr %s432, 8
        %s434 = scalar_lea.vmem %s0, %s433
        %p435 = scmp.lt.s32.totalorder %s28, 1
        %s436 = scalar_select %p435, %s28, 1
        %s437 = smul.addr %s436, 4
        %s438 = smul.addr %s437, 8
        %s439 = scalar_lea.vmem %s2, %s438
        %p440 = scmp.lt.s32.totalorder %s28, 1
        %s441 = scalar_select %p440, %s28, 1
        %s442 = smul.addr %s441, 4
        %s443 = smul.addr %s442, 8
        %s444 = scalar_lea.vmem %s3, %s443
        %p445 = scmp.lt.s32.totalorder %s28, 1
        %s446 = scalar_select %p445, %s28, 1
        %s447 = smul.addr %s446, 4
        %s448 = smul.addr %s447, 8
        %s449 = scalar_lea.vmem %s4, %s448
        %p450 = scmp.lt.s32.totalorder %s28, 1
        %s451 = scalar_select %p450, %s28, 1
        %s452 = smul.addr %s451, 8
        %s453 = smul.addr %s452, 8
        %s454 = scalar_lea.vmem %s5, %s453
        %p455 = scmp.lt.s32.totalorder %s28, 1
        %s456 = scalar_select %p455, %s28, 1
        %s457 = scalar_lea.vmem %s6, %s456
        %p458 = scmp.lt.s32.totalorder %s28, 1
        %s459 = scalar_select %p458, %s28, 1
        %s460 = scalar_lea.vmem %s7, %s459
        %p461 = scmp.lt.s32.totalorder %s28, 1
        %s462 = scalar_select %p461, %s28, 1
        %s463 = smul.addr %s462, 8
        %s464 = scalar_lea.vmem %s8, %s463
        %p465 = scmp.eq.s32.totalorder %s28, 0
        // Predicated region
        $region57: #{tpu_custom_call.1} parent=55 // pred_check
          %p466 = pneg %p465
        $region58: #{tpu_custom_call.1} parent=55 // pred_check_branch
          %468 = sbr.rel (%p466) target = $region60
        $region59: #{tpu_custom_call.1} parent=55 // pred_region
          %v469 = vld [vmem:[%s434] sm:$0xff]
          %v470 = vld [vmem:[%s1] sm:$0xff]
          %v471 = vadd.f32 %v469, %v470
          %vm472 = vcmask 261120
          %473 = vst.msk [vmem:[#allocation2] sm:$0xff] %vm472, %v471
        $region60: #{tpu_custom_call.1} parent=55 // pred_fallthru
          _
        %v474 = vld [vmem:[#allocation2] sm:$0xff]
        %v475 = vlaneseq
        %v476 = vand.u32 %v475, 127
        %vm477 = vcmp.ge.s32.totalorder %v476, 0
        %vm478 = vcmp.ge.s32.totalorder %v476, 8
        %vm479 = vcmp.ge.s32.totalorder %v476, 16
        %vm480 = vcmp.ge.s32.totalorder %v476, 24
        %vm481 = vcmp.lt.s32.totalorder %v476, 8
        %vm482 = vcmp.lt.s32.totalorder %v476, 16
        %vm483 = vcmp.lt.s32.totalorder %v476, 24
        %vm484 = vcmp.lt.s32.totalorder %v476, 32
        %vm485 = vmand %vm477, %vm481
        %vm486 = vmand %vm478, %vm482
        %vm487 = vmand %vm479, %vm483
        %vm488 = vmand %vm480, %vm484
        %v489 = vsel %vm485, 1, 0
        %v490 = vsel %vm486, 1, 0
        %v491 = vsel %vm487, 1, 0
        %v492 = vsel %vm488, 1, 0
        %v493 = vcvt.s32.f32 %v489
        %v494 = vcvt.s32.f32 %v490
        %v495 = vcvt.s32.f32 %v491
        %v496 = vcvt.s32.f32 %v492
        %v497 = vmul.f32 %v493, 0.35355338
        %v498 = vmul.f32 %v494, 0.35355338
        %v499 = vmul.f32 %v495, 0.35355338
        %v500 = vmul.f32 %v496, 0.35355338
        %v501 = vld [vmem:[%s464] sm:$0x3f]
        %v502 = vld [vmem:[%s439] sm:$0xff]
        %v503 = vld [vmem:[%s439 + $0x8] sm:$0xff]
        %v504 = vld [vmem:[%s439 + $0x10] sm:$0xff]
        %v505 = vld [vmem:[%s439 + $0x18] sm:$0xff]
        %v506 = vld [vmem:[%s457] sm:$0x1]
        %v508 = vlaneseq
        %v509 = vshrl.u32 %v508, 7
        %v510 = vsub.s32 0, %v509
        %v511 = vrot.slane %v506, %v510
        %vm513 = vcmask 261120
        %v515 = vsel %vm513, %v474, 0
        %517 = vmatprep.subr.mxu0 0.0
        %518 = vmatpush1.msra.mxu0 %v502
        %519 = vmatprep.subr.mxu0 0.0
        %520 = vmatpush1.msra.mxu0 %v503
        %521 = vmatprep.subr.mxu0 0.0
        %522 = vmatpush1.msra.mxu0 %v504
        %523 = vmatprep.subr.mxu0 0.0
        %524 = vmatpush1.msra.mxu0 %v505
        %525 = vmatprep.subr.mxu0 0.0
        %526 = vmatpush1.msra.mxu0 0.0
        %527 = vmatprep.subr.mxu0 0.0
        %528 = vmatpush1.msra.mxu0 0.0
        %529 = vmatprep.subr.mxu0 0.0
        %530 = vmatpush1.msra.mxu0 0.0
        %531 = vmatprep.subr.mxu0 0.0
        %532 = vmatpush1.msra.mxu0 0.0
        %533 = vmatprep.subr.mxu0 0.0
        %534 = vmatpush1.msra.mxu0 0.0
        %535 = vmatprep.subr.mxu0 0.0
        %536 = vmatpush1.msra.mxu0 0.0
        %537 = vmatprep.subr.mxu0 0.0
        %538 = vmatpush1.msra.mxu0 0.0
        %539 = vmatprep.subr.mxu0 0.0
        %540 = vmatpush1.msra.mxu0 0.0
        %541 = vmatprep.subr.mxu0 0.0
        %542 = vmatpush1.msra.mxu0 0.0
        %543 = vmatprep.subr.mxu0 0.0
        %544 = vmatpush1.msra.mxu0 0.0
        %545 = vmatprep.subr.mxu0 0.0
        %546 = vmatpush1.msra.mxu0 0.0
        %547 = vmatprep.subr.mxu0 0.0
        %548 = vmatpush1.msra.mxu0 0.0
        %549 = vmatprep.subr.mxu0 0.0
        %550 = vmatpush1.msra.mxu0 0.0
        %551 = vmatprep.subr.mxu0 0.0
        %552 = vmatpush1.msra.mxu0 0.0
        %553 = vmatprep.subr.mxu0 0.0
        %554 = vmatpush1.msra.mxu0 0.0
        %555 = vmatprep.subr.mxu0 0.0
        %556 = vmatpush1.msra.mxu0 0.0
        %557 = vmatprep.subr.mxu0 0.0
        %558 = vmatpush1.msra.mxu0 0.0
        %559 = vmatprep.subr.mxu0 0.0
        %560 = vmatpush1.msra.mxu0 0.0
        %561 = vmatprep.subr.mxu0 0.0
        %562 = vmatpush1.msra.mxu0 0.0
        %563 = vmatprep.subr.mxu0 0.0
        %564 = vmatpush1.msra.mxu0 0.0
        %565 = vmatprep.subr.mxu0 0.0
        %566 = vmatpush1.msra.mxu0 0.0
        %567 = vmatprep.subr.mxu0 0.0
        %568 = vmatpush1.msra.mxu0 0.0
        %569 = vmatprep.subr.mxu0 0.0
        %570 = vmatpush1.msra.mxu0 0.0
        %571 = vmatprep.subr.mxu0 0.0
        %572 = vmatpush1.msra.mxu0 0.0
        %573 = vmatprep.subr.mxu0 0.0
        %574 = vmatpush1.msra.mxu0 0.0
        %575 = vmatprep.subr.mxu0 0.0
        %576 = vmatpush1.msra.mxu0 0.0
        %577 = vmatprep.subr.mxu0 0.0
        %578 = vmatpush1.msra.mxu0 0.0
        %579 = vmatprep.subr.mxu0 0.0
        %580 = vmatpush1.msra.mxu0 0.0
        %581 = vmatprep.mubr.f32.mxu0 0.0
        %582 = vmatmul.mubr.f32.gmra.mrb[0].mxu0 %v515
        %v583 = vpop.f32.mrb[0].mxu0
        %v584 = vadd.f32 %v511, %v583
        %v585 = vpop.f32.mrb[0].mxu0
        %586 = vdwg.mxu0
        %v587 = vmul.f32 %v584, %v497
        %v588 = vmul.f32 %v584, %v498
        %v589 = vmul.f32 %v584, %v499
        %v590 = vmul.f32 %v584, %v500
        %595 = vrot.lane.b32.xlu0 %v493, 64
        %v596 = vpop.permute.xlu0 %595
        %597 = vrot.lane.b32.xlu0 %v494, 64
        %v598 = vpop.permute.xlu0 %597
        %599 = vrot.lane.b32.xlu0 %v495, 64
        %v600 = vpop.permute.xlu0 %599
        %601 = vrot.lane.b32.xlu0 %v496, 64
        %v602 = vpop.permute.xlu0 %601
        %v607 = vmul.f32 %v584, %v596
        %v608 = vmul.f32 %v584, %v598
        %v609 = vmul.f32 %v584, %v600
        %v610 = vmul.f32 %v584, %v602
        %612 = vrot.lane.b32.xlu0 %v584, 96
        %v613 = vpop.permute.xlu0 %612
        %v615 = vsel %vm513, %v587, 0
        %v618 = vsel %vm513, %v588, 0
        %v621 = vsel %vm513, %v589, 0
        %v624 = vsel %vm513, %v590, 0
        %v626 = vsel %vm513, %v613, 0
        %628 = vmatprep.subr.mxu0 0.0
        %629 = vmatpush1.xpose.msra.mxu0 %v626
        %630 = vmatprep.subr.mxu0 0.0
        %631 = vmatpush1.xpose.msra.mxu0 0.0
        %632 = vmatprep.subr.mxu0 0.0
        %633 = vmatpush1.xpose.msra.mxu0 0.0
        %634 = vmatprep.subr.mxu0 0.0
        %635 = vmatpush1.xpose.msra.mxu0 0.0
        %636 = vmatprep.subr.mxu0 0.0
        %637 = vmatpush1.xpose.msra.mxu0 0.0
        %638 = vmatprep.subr.mxu0 0.0
        %639 = vmatpush1.xpose.msra.mxu0 0.0
        %640 = vmatprep.subr.mxu0 0.0
        %641 = vmatpush1.xpose.msra.mxu0 0.0
        %642 = vmatprep.subr.mxu0 0.0
        %643 = vmatpush1.xpose.msra.mxu0 0.0
        %644 = vmatprep.subr.mxu0 0.0
        %645 = vmatpush1.xpose.msra.mxu0 0.0
        %646 = vmatprep.subr.mxu0 0.0
        %647 = vmatpush1.xpose.msra.mxu0 0.0
        %648 = vmatprep.subr.mxu0 0.0
        %649 = vmatpush1.xpose.msra.mxu0 0.0
        %650 = vmatprep.subr.mxu0 0.0
        %651 = vmatpush1.xpose.msra.mxu0 0.0
        %652 = vmatprep.subr.mxu0 0.0
        %653 = vmatpush1.xpose.msra.mxu0 0.0
        %654 = vmatprep.subr.mxu0 0.0
        %655 = vmatpush1.xpose.msra.mxu0 0.0
        %656 = vmatprep.subr.mxu0 0.0
        %657 = vmatpush1.xpose.msra.mxu0 0.0
        %658 = vmatprep.subr.mxu0 0.0
        %659 = vmatpush1.xpose.msra.mxu0 0.0
        %660 = vmatprep.subr.mxu0 0.0
        %661 = vmatpush1.xpose.msra.mxu0 0.0
        %662 = vmatprep.subr.mxu0 0.0
        %663 = vmatpush1.xpose.msra.mxu0 0.0
        %664 = vmatprep.subr.mxu0 0.0
        %665 = vmatpush1.xpose.msra.mxu0 0.0
        %666 = vmatprep.subr.mxu0 0.0
        %667 = vmatpush1.xpose.msra.mxu0 0.0
        %668 = vmatprep.subr.mxu0 0.0
        %669 = vmatpush1.xpose.msra.mxu0 0.0
        %670 = vmatprep.subr.mxu0 0.0
        %671 = vmatpush1.xpose.msra.mxu0 0.0
        %672 = vmatprep.subr.mxu0 0.0
        %673 = vmatpush1.xpose.msra.mxu0 0.0
        %674 = vmatprep.subr.mxu0 0.0
        %675 = vmatpush1.xpose.msra.mxu0 0.0
        %676 = vmatprep.subr.mxu0 0.0
        %677 = vmatpush1.xpose.msra.mxu0 0.0
        %678 = vmatprep.subr.mxu0 0.0
        %679 = vmatpush1.xpose.msra.mxu0 0.0
        %680 = vmatprep.subr.mxu0 0.0
        %681 = vmatpush1.xpose.msra.mxu0 0.0
        %682 = vmatprep.subr.mxu0 0.0
        %683 = vmatpush1.xpose.msra.mxu0 0.0
        %684 = vmatprep.subr.mxu0 0.0
        %685 = vmatpush1.xpose.msra.mxu0 0.0
        %686 = vmatprep.subr.mxu0 0.0
        %687 = vmatpush1.xpose.msra.mxu0 0.0
        %688 = vmatprep.subr.mxu0 0.0
        %689 = vmatpush1.xpose.msra.mxu0 0.0
        %690 = vmatprep.subr.mxu0 0.0
        %691 = vmatpush1.xpose.msra.mxu0 0.0
        %692 = vmatprep.mubr.f32.mxu0 0.0
        %693 = vmatmul.mubr.f32.gmra.mrb[0].mxu0 %v615
        %v694 = vpop.f32.mrb[0].mxu0
        %v695 = vadd.f32 0.0, %v694
        %v696 = vpop.f32.mrb[0].mxu0
        %697 = vmatprep.mubr.f32.mxu0 0.0
        %698 = vmatmul.mubr.f32.gmra.mrb[0].mxu0 %v618
        %v699 = vpop.f32.mrb[0].mxu0
        %v700 = vadd.f32 0.0, %v699
        %v701 = vpop.f32.mrb[0].mxu0
        %702 = vmatprep.mubr.f32.mxu0 0.0
        %703 = vmatmul.mubr.f32.gmra.mrb[0].mxu0 %v621
        %v704 = vpop.f32.mrb[0].mxu0
        %v705 = vadd.f32 0.0, %v704
        %v706 = vpop.f32.mrb[0].mxu0
        %707 = vmatprep.mubr.f32.mxu0 0.0
        %708 = vmatmul.mubr.f32.gmra.mrb[0].mxu0 %v624
        %v709 = vpop.f32.mrb[0].mxu0
        %v710 = vadd.f32 0.0, %v709
        %v711 = vpop.f32.mrb[0].mxu0
        %712 = vdwg.mxu0
        %vm713 = vcmask 64512
        %v714 = vsel %vm713, %v695, -inf
        %715 = vmax.xlane.f32.xlu0 %v714
        %v716 = vpop.xlane.xlu0 %715
        %v717 = vsel %vm713, %v700, -inf
        %718 = vmax.xlane.f32.xlu0 %v717
        %v719 = vpop.xlane.xlu0 %718
        %v720 = vsel %vm713, %v705, -inf
        %721 = vmax.xlane.f32.xlu0 %v720
        %v722 = vpop.xlane.xlu0 %721
        %v723 = vsel %vm713, %v710, -inf
        %724 = vmax.xlane.f32.xlu0 %v723
        %v725 = vpop.xlane.xlu0 %724
        %v726 = vsub.f32 %v695, %v716
        %v727 = vsub.f32 %v700, %v719
        %v728 = vsub.f32 %v705, %v722
        %v729 = vsub.f32 %v710, %v725
        %v730 = vmul.f32 %v726, 1.442695
        %v731 = vpow.pop %v730
        %v732 = vmul.f32 %v727, 1.442695
        %v733 = vpow.pop %v732
        %v734 = vmul.f32 %v728, 1.442695
        %v735 = vpow.pop %v734
        %v736 = vmul.f32 %v729, 1.442695
        %v737 = vpow.pop %v736
        %v738 = vsel %vm713, %v731, 0.0
        %739 = vadd.xlane.f32.xlu0 %v738
        %v740 = vpop.xlane.xlu0 %739
        %v741 = vsel %vm713, %v733, 0.0
        %742 = vadd.xlane.f32.xlu0 %v741
        %v743 = vpop.xlane.xlu0 %742
        %v744 = vsel %vm713, %v735, 0.0
        %745 = vadd.xlane.f32.xlu0 %v744
        %v746 = vpop.xlane.xlu0 %745
        %v747 = vsel %vm713, %v737, 0.0
        %748 = vadd.xlane.f32.xlu0 %v747
        %v749 = vpop.xlane.xlu0 %748
        %v750 = vrcp.pop %v740
        %v751 = vmul.f32 %v731, %v750
        %v752 = vrcp.pop %v743
        %v753 = vmul.f32 %v733, %v752
        %v754 = vrcp.pop %v746
        %v755 = vmul.f32 %v735, %v754
        %v756 = vrcp.pop %v749
        %v757 = vmul.f32 %v737, %v756
        %759 = vrot.lane.b32.xlu0 %v607, 64
        %v760 = vpop.permute.xlu0 %759
        %v763 = vsel %vm713, %v751, 0
        %765 = vmatprep.subr.mxu0 0.0
        %766 = vmatpush1.msra.mxu0 %v760
        %767 = vmatprep.subr.mxu0 0.0
        %768 = vmatpush1.msra.mxu0 0.0
        %769 = vmatprep.subr.mxu0 0.0
        %770 = vmatpush1.msra.mxu0 0.0
        %771 = vmatprep.subr.mxu0 0.0
        %772 = vmatpush1.msra.mxu0 0.0
        %773 = vmatprep.subr.mxu0 0.0
        %774 = vmatpush1.msra.mxu0 0.0
        %775 = vmatprep.subr.mxu0 0.0
        %776 = vmatpush1.msra.mxu0 0.0
        %777 = vmatprep.subr.mxu0 0.0
        %778 = vmatpush1.msra.mxu0 0.0
        %779 = vmatprep.subr.mxu0 0.0
        %780 = vmatpush1.msra.mxu0 0.0
        %781 = vmatprep.subr.mxu0 0.0
        %782 = vmatpush1.msra.mxu0 0.0
        %783 = vmatprep.subr.mxu0 0.0
        %784 = vmatpush1.msra.mxu0 0.0
        %785 = vmatprep.subr.mxu0 0.0
        %786 = vmatpush1.msra.mxu0 0.0
        %787 = vmatprep.subr.mxu0 0.0
        %788 = vmatpush1.msra.mxu0 0.0
        %789 = vmatprep.subr.mxu0 0.0
        %790 = vmatpush1.msra.mxu0 0.0
        %791 = vmatprep.subr.mxu0 0.0
        %792 = vmatpush1.msra.mxu0 0.0
        %793 = vmatprep.subr.mxu0 0.0
        %794 = vmatpush1.msra.mxu0 0.0
        %795 = vmatprep.subr.mxu0 0.0
        %796 = vmatpush1.msra.mxu0 0.0
        %797 = vmatprep.subr.mxu0 0.0
        %798 = vmatpush1.msra.mxu0 0.0
        %799 = vmatprep.subr.mxu0 0.0
        %800 = vmatpush1.msra.mxu0 0.0
        %801 = vmatprep.subr.mxu0 0.0
        %802 = vmatpush1.msra.mxu0 0.0
        %803 = vmatprep.subr.mxu0 0.0
        %804 = vmatpush1.msra.mxu0 0.0
        %805 = vmatprep.subr.mxu0 0.0
        %806 = vmatpush1.msra.mxu0 0.0
        %807 = vmatprep.subr.mxu0 0.0
        %808 = vmatpush1.msra.mxu0 0.0
        %809 = vmatprep.subr.mxu0 0.0
        %810 = vmatpush1.msra.mxu0 0.0
        %811 = vmatprep.subr.mxu0 0.0
        %812 = vmatpush1.msra.mxu0 0.0
        %813 = vmatprep.subr.mxu0 0.0
        %814 = vmatpush1.msra.mxu0 0.0
        %815 = vmatprep.subr.mxu0 0.0
        %816 = vmatpush1.msra.mxu0 0.0
        %817 = vmatprep.subr.mxu0 0.0
        %818 = vmatpush1.msra.mxu0 0.0
        %819 = vmatprep.subr.mxu0 0.0
        %820 = vmatpush1.msra.mxu0 0.0
        %821 = vmatprep.subr.mxu0 0.0
        %822 = vmatpush1.msra.mxu0 0.0
        %823 = vmatprep.subr.mxu0 0.0
        %824 = vmatpush1.msra.mxu0 0.0
        %825 = vmatprep.subr.mxu0 0.0
        %826 = vmatpush1.msra.mxu0 0.0
        %827 = vmatprep.subr.mxu0 0.0
        %828 = vmatpush1.msra.mxu0 0.0
        %829 = vmatprep.mubr.f32.mxu0 0.0
        %830 = vmatmul.mubr.f32.gmra.mrb[0].mxu0 %v763
        %v831 = vpop.f32.mrb[0].mxu0
        %v832 = vadd.f32 0.0, %v831
        %v833 = vpop.f32.mrb[0].mxu0
        %834 = vdwg.mxu0
        %836 = vrot.lane.b32.xlu0 %v608, 64
        %v837 = vpop.permute.xlu0 %836
        %v840 = vsel %vm713, %v753, 0
        %842 = vmatprep.subr.mxu0 0.0
        %843 = vmatpush1.msra.mxu0 %v837
        %844 = vmatprep.subr.mxu0 0.0
        %845 = vmatpush1.msra.mxu0 0.0
        %846 = vmatprep.subr.mxu0 0.0
        %847 = vmatpush1.msra.mxu0 0.0
        %848 = vmatprep.subr.mxu0 0.0
        %849 = vmatpush1.msra.mxu0 0.0
        %850 = vmatprep.subr.mxu0 0.0
        %851 = vmatpush1.msra.mxu0 0.0
        %852 = vmatprep.subr.mxu0 0.0
        %853 = vmatpush1.msra.mxu0 0.0
        %854 = vmatprep.subr.mxu0 0.0
        %855 = vmatpush1.msra.mxu0 0.0
        %856 = vmatprep.subr.mxu0 0.0
        %857 = vmatpush1.msra.mxu0 0.0
        %858 = vmatprep.subr.mxu0 0.0
        %859 = vmatpush1.msra.mxu0 0.0
        %860 = vmatprep.subr.mxu0 0.0
        %861 = vmatpush1.msra.mxu0 0.0
        %862 = vmatprep.subr.mxu0 0.0
        %863 = vmatpush1.msra.mxu0 0.0
        %864 = vmatprep.subr.mxu0 0.0
        %865 = vmatpush1.msra.mxu0 0.0
        %866 = vmatprep.subr.mxu0 0.0
        %867 = vmatpush1.msra.mxu0 0.0
        %868 = vmatprep.subr.mxu0 0.0
        %869 = vmatpush1.msra.mxu0 0.0
        %870 = vmatprep.subr.mxu0 0.0
        %871 = vmatpush1.msra.mxu0 0.0
        %872 = vmatprep.subr.mxu0 0.0
        %873 = vmatpush1.msra.mxu0 0.0
        %874 = vmatprep.subr.mxu0 0.0
        %875 = vmatpush1.msra.mxu0 0.0
        %876 = vmatprep.subr.mxu0 0.0
        %877 = vmatpush1.msra.mxu0 0.0
        %878 = vmatprep.subr.mxu0 0.0
        %879 = vmatpush1.msra.mxu0 0.0
        %880 = vmatprep.subr.mxu0 0.0
        %881 = vmatpush1.msra.mxu0 0.0
        %882 = vmatprep.subr.mxu0 0.0
        %883 = vmatpush1.msra.mxu0 0.0
        %884 = vmatprep.subr.mxu0 0.0
        %885 = vmatpush1.msra.mxu0 0.0
        %886 = vmatprep.subr.mxu0 0.0
        %887 = vmatpush1.msra.mxu0 0.0
        %888 = vmatprep.subr.mxu0 0.0
        %889 = vmatpush1.msra.mxu0 0.0
        %890 = vmatprep.subr.mxu0 0.0
        %891 = vmatpush1.msra.mxu0 0.0
        %892 = vmatprep.subr.mxu0 0.0
        %893 = vmatpush1.msra.mxu0 0.0
        %894 = vmatprep.subr.mxu0 0.0
        %895 = vmatpush1.msra.mxu0 0.0
        %896 = vmatprep.subr.mxu0 0.0
        %897 = vmatpush1.msra.mxu0 0.0
        %898 = vmatprep.subr.mxu0 0.0
        %899 = vmatpush1.msra.mxu0 0.0
        %900 = vmatprep.subr.mxu0 0.0
        %901 = vmatpush1.msra.mxu0 0.0
        %902 = vmatprep.subr.mxu0 0.0
        %903 = vmatpush1.msra.mxu0 0.0
        %904 = vmatprep.subr.mxu0 0.0
        %905 = vmatpush1.msra.mxu0 0.0
        %906 = vmatprep.mubr.f32.mxu0 0.0
        %907 = vmatmul.mubr.f32.gmra.mrb[0].mxu0 %v840
        %v908 = vpop.f32.mrb[0].mxu0
        %v909 = vadd.f32 0.0, %v908
        %v910 = vpop.f32.mrb[0].mxu0
        %911 = vdwg.mxu0
        %913 = vrot.lane.b32.xlu0 %v609, 64
        %v914 = vpop.permute.xlu0 %913
        %v917 = vsel %vm713, %v755, 0
        %919 = vmatprep.subr.mxu0 0.0
        %920 = vmatpush1.msra.mxu0 %v914
        %921 = vmatprep.subr.mxu0 0.0
        %922 = vmatpush1.msra.mxu0 0.0
        %923 = vmatprep.subr.mxu0 0.0
        %924 = vmatpush1.msra.mxu0 0.0
        %925 = vmatprep.subr.mxu0 0.0
        %926 = vmatpush1.msra.mxu0 0.0
        %927 = vmatprep.subr.mxu0 0.0
        %928 = vmatpush1.msra.mxu0 0.0
        %929 = vmatprep.subr.mxu0 0.0
        %930 = vmatpush1.msra.mxu0 0.0
        %931 = vmatprep.subr.mxu0 0.0
        %932 = vmatpush1.msra.mxu0 0.0
        %933 = vmatprep.subr.mxu0 0.0
        %934 = vmatpush1.msra.mxu0 0.0
        %935 = vmatprep.subr.mxu0 0.0
        %936 = vmatpush1.msra.mxu0 0.0
        %937 = vmatprep.subr.mxu0 0.0
        %938 = vmatpush1.msra.mxu0 0.0
        %939 = vmatprep.subr.mxu0 0.0
        %940 = vmatpush1.msra.mxu0 0.0
        %941 = vmatprep.subr.mxu0 0.0
        %942 = vmatpush1.msra.mxu0 0.0
        %943 = vmatprep.subr.mxu0 0.0
        %944 = vmatpush1.msra.mxu0 0.0
        %945 = vmatprep.subr.mxu0 0.0
        %946 = vmatpush1.msra.mxu0 0.0
        %947 = vmatprep.subr.mxu0 0.0
        %948 = vmatpush1.msra.mxu0 0.0
        %949 = vmatprep.subr.mxu0 0.0
        %950 = vmatpush1.msra.mxu0 0.0
        %951 = vmatprep.subr.mxu0 0.0
        %952 = vmatpush1.msra.mxu0 0.0
        %953 = vmatprep.subr.mxu0 0.0
        %954 = vmatpush1.msra.mxu0 0.0
        %955 = vmatprep.subr.mxu0 0.0
        %956 = vmatpush1.msra.mxu0 0.0
        %957 = vmatprep.subr.mxu0 0.0
        %958 = vmatpush1.msra.mxu0 0.0
        %959 = vmatprep.subr.mxu0 0.0
        %960 = vmatpush1.msra.mxu0 0.0
        %961 = vmatprep.subr.mxu0 0.0
        %962 = vmatpush1.msra.mxu0 0.0
        %963 = vmatprep.subr.mxu0 0.0
        %964 = vmatpush1.msra.mxu0 0.0
        %965 = vmatprep.subr.mxu0 0.0
        %966 = vmatpush1.msra.mxu0 0.0
        %967 = vmatprep.subr.mxu0 0.0
        %968 = vmatpush1.msra.mxu0 0.0
        %969 = vmatprep.subr.mxu0 0.0
        %970 = vmatpush1.msra.mxu0 0.0
        %971 = vmatprep.subr.mxu0 0.0
        %972 = vmatpush1.msra.mxu0 0.0
        %973 = vmatprep.subr.mxu0 0.0
        %974 = vmatpush1.msra.mxu0 0.0
        %975 = vmatprep.subr.mxu0 0.0
        %976 = vmatpush1.msra.mxu0 0.0
        %977 = vmatprep.subr.mxu0 0.0
        %978 = vmatpush1.msra.mxu0 0.0
        %979 = vmatprep.subr.mxu0 0.0
        %980 = vmatpush1.msra.mxu0 0.0
        %981 = vmatprep.subr.mxu0 0.0
        %982 = vmatpush1.msra.mxu0 0.0
        %983 = vmatprep.mubr.f32.mxu0 0.0
        %984 = vmatmul.mubr.f32.gmra.mrb[0].mxu0 %v917
        %v985 = vpop.f32.mrb[0].mxu0
        %v986 = vadd.f32 0.0, %v985
        %v987 = vpop.f32.mrb[0].mxu0
        %988 = vdwg.mxu0
        %990 = vrot.lane.b32.xlu0 %v610, 64
        %v991 = vpop.permute.xlu0 %990
        %v994 = vsel %vm713, %v757, 0
        %996 = vmatprep.subr.mxu0 0.0
        %997 = vmatpush1.msra.mxu0 %v991
        %998 = vmatprep.subr.mxu0 0.0
        %999 = vmatpush1.msra.mxu0 0.0
        %1000 = vmatprep.subr.mxu0 0.0
        %1001 = vmatpush1.msra.mxu0 0.0
        %1002 = vmatprep.subr.mxu0 0.0
        %1003 = vmatpush1.msra.mxu0 0.0
        %1004 = vmatprep.subr.mxu0 0.0
        %1005 = vmatpush1.msra.mxu0 0.0
        %1006 = vmatprep.subr.mxu0 0.0
        %1007 = vmatpush1.msra.mxu0 0.0
        %1008 = vmatprep.subr.mxu0 0.0
        %1009 = vmatpush1.msra.mxu0 0.0
        %1010 = vmatprep.subr.mxu0 0.0
        %1011 = vmatpush1.msra.mxu0 0.0
        %1012 = vmatprep.subr.mxu0 0.0
        %1013 = vmatpush1.msra.mxu0 0.0
        %1014 = vmatprep.subr.mxu0 0.0
        %1015 = vmatpush1.msra.mxu0 0.0
        %1016 = vmatprep.subr.mxu0 0.0
        %1017 = vmatpush1.msra.mxu0 0.0
        %1018 = vmatprep.subr.mxu0 0.0
        %1019 = vmatpush1.msra.mxu0 0.0
        %1020 = vmatprep.subr.mxu0 0.0
        %1021 = vmatpush1.msra.mxu0 0.0
        %1022 = vmatprep.subr.mxu0 0.0
        %1023 = vmatpush1.msra.mxu0 0.0
        %1024 = vmatprep.subr.mxu0 0.0
        %1025 = vmatpush1.msra.mxu0 0.0
        %1026 = vmatprep.subr.mxu0 0.0
        %1027 = vmatpush1.msra.mxu0 0.0
        %1028 = vmatprep.subr.mxu0 0.0
        %1029 = vmatpush1.msra.mxu0 0.0
        %1030 = vmatprep.subr.mxu0 0.0
        %1031 = vmatpush1.msra.mxu0 0.0
        %1032 = vmatprep.subr.mxu0 0.0
        %1033 = vmatpush1.msra.mxu0 0.0
        %1034 = vmatprep.subr.mxu0 0.0
        %1035 = vmatpush1.msra.mxu0 0.0
        %1036 = vmatprep.subr.mxu0 0.0
        %1037 = vmatpush1.msra.mxu0 0.0
        %1038 = vmatprep.subr.mxu0 0.0
        %1039 = vmatpush1.msra.mxu0 0.0
        %1040 = vmatprep.subr.mxu0 0.0
        %1041 = vmatpush1.msra.mxu0 0.0
        %1042 = vmatprep.subr.mxu0 0.0
        %1043 = vmatpush1.msra.mxu0 0.0
        %1044 = vmatprep.subr.mxu0 0.0
        %1045 = vmatpush1.msra.mxu0 0.0
        %1046 = vmatprep.subr.mxu0 0.0
        %1047 = vmatpush1.msra.mxu0 0.0
        %1048 = vmatprep.subr.mxu0 0.0
        %1049 = vmatpush1.msra.mxu0 0.0
        %1050 = vmatprep.subr.mxu0 0.0
        %1051 = vmatpush1.msra.mxu0 0.0
        %1052 = vmatprep.subr.mxu0 0.0
        %1053 = vmatpush1.msra.mxu0 0.0
        %1054 = vmatprep.subr.mxu0 0.0
        %1055 = vmatpush1.msra.mxu0 0.0
        %1056 = vmatprep.subr.mxu0 0.0
        %1057 = vmatpush1.msra.mxu0 0.0
        %1058 = vmatprep.subr.mxu0 0.0
        %1059 = vmatpush1.msra.mxu0 0.0
        %1060 = vmatprep.mubr.f32.mxu0 0.0
        %1061 = vmatmul.mubr.f32.gmra.mrb[0].mxu0 %v994
        %v1062 = vpop.f32.mrb[0].mxu0
        %v1063 = vadd.f32 0.0, %v1062
        %v1064 = vpop.f32.mrb[0].mxu0
        %1065 = vdwg.mxu0
        %v1066 = vsel %vm513, %v832, 0.0
        %v1067 = vsel %vm513, %v909, 0.0
        %v1068 = vadd.f32 %v1066, %v1067
        %v1069 = vsel %vm513, %v986, 0.0
        %v1070 = vadd.f32 %v1068, %v1069
        %v1071 = vsel %vm513, %v1063, 0.0
        %v1072 = vadd.f32 %v1070, %v1071
        %v1073 = vld [vmem:[%s444] sm:$0xff]
        %v1074 = vld [vmem:[%s444 + $0x8] sm:$0xff]
        %v1075 = vld [vmem:[%s444 + $0x10] sm:$0xff]
        %v1076 = vld [vmem:[%s444 + $0x18] sm:$0xff]
        %v1077 = vlaneseq
        %v1078 = vshrl.u32 %v1077, 7
        %v1079 = vsub.s32 0, %v1078
        %v1080 = vrot.slane %v501, %v1079
        %v1082 = vsel %vm513, %v1072, 0
        %1084 = vmatprep.subr.mxu0 0.0
        %1085 = vmatpush1.msra.mxu0 %v1073
        %1086 = vmatprep.subr.mxu0 0.0
        %1087 = vmatpush1.msra.mxu0 %v1074
        %1088 = vmatprep.subr.mxu0 0.0
        %1089 = vmatpush1.msra.mxu0 %v1075
        %1090 = vmatprep.subr.mxu0 0.0
        %1091 = vmatpush1.msra.mxu0 %v1076
        %1092 = vmatprep.subr.mxu0 0.0
        %1093 = vmatpush1.msra.mxu0 0.0
        %1094 = vmatprep.subr.mxu0 0.0
        %1095 = vmatpush1.msra.mxu0 0.0
        %1096 = vmatprep.subr.mxu0 0.0
        %1097 = vmatpush1.msra.mxu0 0.0
        %1098 = vmatprep.subr.mxu0 0.0
        %1099 = vmatpush1.msra.mxu0 0.0
        %1100 = vmatprep.subr.mxu0 0.0
        %1101 = vmatpush1.msra.mxu0 0.0
        %1102 = vmatprep.subr.mxu0 0.0
        %1103 = vmatpush1.msra.mxu0 0.0
        %1104 = vmatprep.subr.mxu0 0.0
        %1105 = vmatpush1.msra.mxu0 0.0
        %1106 = vmatprep.subr.mxu0 0.0
        %1107 = vmatpush1.msra.mxu0 0.0
        %1108 = vmatprep.subr.mxu0 0.0
        %1109 = vmatpush1.msra.mxu0 0.0
        %1110 = vmatprep.subr.mxu0 0.0
        %1111 = vmatpush1.msra.mxu0 0.0
        %1112 = vmatprep.subr.mxu0 0.0
        %1113 = vmatpush1.msra.mxu0 0.0
        %1114 = vmatprep.subr.mxu0 0.0
        %1115 = vmatpush1.msra.mxu0 0.0
        %1116 = vmatprep.subr.mxu0 0.0
        %1117 = vmatpush1.msra.mxu0 0.0
        %1118 = vmatprep.subr.mxu0 0.0
        %1119 = vmatpush1.msra.mxu0 0.0
        %1120 = vmatprep.subr.mxu0 0.0
        %1121 = vmatpush1.msra.mxu0 0.0
        %1122 = vmatprep.subr.mxu0 0.0
        %1123 = vmatpush1.msra.mxu0 0.0
        %1124 = vmatprep.subr.mxu0 0.0
        %1125 = vmatpush1.msra.mxu0 0.0
        %1126 = vmatprep.subr.mxu0 0.0
        %1127 = vmatpush1.msra.mxu0 0.0
        %1128 = vmatprep.subr.mxu0 0.0
        %1129 = vmatpush1.msra.mxu0 0.0
        %1130 = vmatprep.subr.mxu0 0.0
        %1131 = vmatpush1.msra.mxu0 0.0
        %1132 = vmatprep.subr.mxu0 0.0
        %1133 = vmatpush1.msra.mxu0 0.0
        %1134 = vmatprep.subr.mxu0 0.0
        %1135 = vmatpush1.msra.mxu0 0.0
        %1136 = vmatprep.subr.mxu0 0.0
        %1137 = vmatpush1.msra.mxu0 0.0
        %1138 = vmatprep.subr.mxu0 0.0
        %1139 = vmatpush1.msra.mxu0 0.0
        %1140 = vmatprep.subr.mxu0 0.0
        %1141 = vmatpush1.msra.mxu0 0.0
        %1142 = vmatprep.subr.mxu0 0.0
        %1143 = vmatpush1.msra.mxu0 0.0
        %1144 = vmatprep.subr.mxu0 0.0
        %1145 = vmatpush1.msra.mxu0 0.0
        %1146 = vmatprep.subr.mxu0 0.0
        %1147 = vmatpush1.msra.mxu0 0.0
        %1148 = vmatprep.mubr.f32.mxu0 0.0
        %1149 = vmatmul.mubr.f32.gmra.mrb[0].mxu0 %v1082
        %v1150 = vpop.f32.mrb[0].mxu0
        %v1151 = vadd.f32 %v1080, %v1150
        %v1152 = vpop.f32.mrb[0].mxu0
        %1153 = vdwg.mxu0
        %v1154 = vadd.f32 %v474, %v1151
        %v1155 = vsel %vm513, %v1154, 0.0
        %1156 = vadd.xlane.f32.xlu0 %v1155
        %v1157 = vpop.xlane.xlu0 %1156
        %v1158 = vrcp.pop 32.0
        %v1159 = vmul.f32 %v1157, %v1158
        %v1160 = vsub.f32 %v1154, %v1159
        %v1161 = vmul.f32 %v1160, %v1160
        %v1162 = vsel %vm513, %v1161, 0.0
        %1163 = vadd.xlane.f32.xlu0 %v1162
        %v1164 = vpop.xlane.xlu0 %1163
        %v1165 = vmul.f32 %v1164, %v1158
        %v1166 = vadd.f32 %v1165, 1e-05
        %v1167 = vrsqrt.pop %v1166
        %v1168 = vmul.f32 %v1160, %v1167
        %v1169 = vlaneseq
        %v1170 = vshrl.u32 %v1169, 7
        %v1171 = vsub.s32 1, %v1170
        %v1172 = vrot.slane %v501, %v1171
        %v1173 = vmul.f32 %v1168, %v1172
        %v1174 = vlaneseq
        %v1175 = vshrl.u32 %v1174, 7
        %v1176 = vsub.s32 2, %v1175
        %v1177 = vrot.slane %v501, %v1176
        %v1178 = vadd.f32 %v1173, %v1177
        %v1179 = vld [vmem:[%s449] sm:$0xff]
        %v1180 = vld [vmem:[%s449 + $0x8] sm:$0xff]
        %v1181 = vld [vmem:[%s449 + $0x10] sm:$0xff]
        %v1182 = vld [vmem:[%s449 + $0x18] sm:$0xff]
        %v1183 = vld [vmem:[%s460] sm:$0x1]
        %v1185 = vlaneseq
        %v1186 = vshrl.u32 %v1185, 7
        %v1187 = vsub.s32 0, %v1186
        %v1188 = vrot.slane %v1183, %v1187
        %v1191 = vsel %vm513, %v1178, 0
        %1193 = vmatprep.subr.mxu0 0.0
        %1194 = vmatpush1.msra.mxu0 %v1179
        %1195 = vmatprep.subr.mxu0 0.0
        %1196 = vmatpush1.msra.mxu0 %v1180
        %1197 = vmatprep.subr.mxu0 0.0
        %1198 = vmatpush1.msra.mxu0 %v1181
        %1199 = vmatprep.subr.mxu0 0.0
        %1200 = vmatpush1.msra.mxu0 %v1182
        %1201 = vmatprep.subr.mxu0 0.0
        %1202 = vmatpush1.msra.mxu0 0.0
        %1203 = vmatprep.subr.mxu0 0.0
        %1204 = vmatpush1.msra.mxu0 0.0
        %1205 = vmatprep.subr.mxu0 0.0
        %1206 = vmatpush1.msra.mxu0 0.0
        %1207 = vmatprep.subr.mxu0 0.0
        %1208 = vmatpush1.msra.mxu0 0.0
        %1209 = vmatprep.subr.mxu0 0.0
        %1210 = vmatpush1.msra.mxu0 0.0
        %1211 = vmatprep.subr.mxu0 0.0
        %1212 = vmatpush1.msra.mxu0 0.0
        %1213 = vmatprep.subr.mxu0 0.0
        %1214 = vmatpush1.msra.mxu0 0.0
        %1215 = vmatprep.subr.mxu0 0.0
        %1216 = vmatpush1.msra.mxu0 0.0
        %1217 = vmatprep.subr.mxu0 0.0
        %1218 = vmatpush1.msra.mxu0 0.0
        %1219 = vmatprep.subr.mxu0 0.0
        %1220 = vmatpush1.msra.mxu0 0.0
        %1221 = vmatprep.subr.mxu0 0.0
        %1222 = vmatpush1.msra.mxu0 0.0
        %1223 = vmatprep.subr.mxu0 0.0
        %1224 = vmatpush1.msra.mxu0 0.0
        %1225 = vmatprep.subr.mxu0 0.0
        %1226 = vmatpush1.msra.mxu0 0.0
        %1227 = vmatprep.subr.mxu0 0.0
        %1228 = vmatpush1.msra.mxu0 0.0
        %1229 = vmatprep.subr.mxu0 0.0
        %1230 = vmatpush1.msra.mxu0 0.0
        %1231 = vmatprep.subr.mxu0 0.0
        %1232 = vmatpush1.msra.mxu0 0.0
        %1233 = vmatprep.subr.mxu0 0.0
        %1234 = vmatpush1.msra.mxu0 0.0
        %1235 = vmatprep.subr.mxu0 0.0
        %1236 = vmatpush1.msra.mxu0 0.0
        %1237 = vmatprep.subr.mxu0 0.0
        %1238 = vmatpush1.msra.mxu0 0.0
        %1239 = vmatprep.subr.mxu0 0.0
        %1240 = vmatpush1.msra.mxu0 0.0
        %1241 = vmatprep.subr.mxu0 0.0
        %1242 = vmatpush1.msra.mxu0 0.0
        %1243 = vmatprep.subr.mxu0 0.0
        %1244 = vmatpush1.msra.mxu0 0.0
        %1245 = vmatprep.subr.mxu0 0.0
        %1246 = vmatpush1.msra.mxu0 0.0
        %1247 = vmatprep.subr.mxu0 0.0
        %1248 = vmatpush1.msra.mxu0 0.0
        %1249 = vmatprep.subr.mxu0 0.0
        %1250 = vmatpush1.msra.mxu0 0.0
        %1251 = vmatprep.subr.mxu0 0.0
        %1252 = vmatpush1.msra.mxu0 0.0
        %1253 = vmatprep.subr.mxu0 0.0
        %1254 = vmatpush1.msra.mxu0 0.0
        %1255 = vmatprep.subr.mxu0 0.0
        %1256 = vmatpush1.msra.mxu0 0.0
        %1257 = vmatprep.mubr.f32.mxu0 0.0
        %1258 = vmatmul.mubr.f32.gmra.mrb[0].mxu0 %v1191
        %v1259 = vpop.f32.mrb[0].mxu0
        %v1260 = vadd.f32 %v1188, %v1259
        %v1261 = vpop.f32.mrb[0].mxu0
        %1262 = vdwg.mxu0
        %v1263 = vmax.f32 %v1260, 0.0
        %v1264 = vld [vmem:[%s454] sm:$0xff]
        %v1265 = vld [vmem:[%s454 + $0x8] sm:$0xff]
        %v1266 = vld [vmem:[%s454 + $0x10] sm:$0xff]
        %v1267 = vld [vmem:[%s454 + $0x18] sm:$0xff]
        %v1268 = vld [vmem:[%s454 + $0x20] sm:$0xff]
        %v1269 = vld [vmem:[%s454 + $0x28] sm:$0xff]
        %v1270 = vld [vmem:[%s454 + $0x30] sm:$0xff]
        %v1271 = vld [vmem:[%s454 + $0x38] sm:$0xff]
        %v1272 = vlaneseq
        %v1273 = vshrl.u32 %v1272, 7
        %v1274 = vsub.s32 3, %v1273
        %v1275 = vrot.slane %v501, %v1274
        %vm1276 = vcmask 523264
        %v1278 = vsel %vm1276, %v1263, 0
        %1280 = vmatprep.subr.mxu0 0.0
        %1281 = vmatpush1.msra.mxu0 %v1264
        %1282 = vmatprep.subr.mxu0 0.0
        %1283 = vmatpush1.msra.mxu0 %v1265
        %1284 = vmatprep.subr.mxu0 0.0
        %1285 = vmatpush1.msra.mxu0 %v1266
        %1286 = vmatprep.subr.mxu0 0.0
        %1287 = vmatpush1.msra.mxu0 %v1267
        %1288 = vmatprep.subr.mxu0 0.0
        %1289 = vmatpush1.msra.mxu0 %v1268
        %1290 = vmatprep.subr.mxu0 0.0
        %1291 = vmatpush1.msra.mxu0 %v1269
        %1292 = vmatprep.subr.mxu0 0.0
        %1293 = vmatpush1.msra.mxu0 %v1270
        %1294 = vmatprep.subr.mxu0 0.0
        %1295 = vmatpush1.msra.mxu0 %v1271
        %1296 = vmatprep.subr.mxu0 0.0
        %1297 = vmatpush1.msra.mxu0 0.0
        %1298 = vmatprep.subr.mxu0 0.0
        %1299 = vmatpush1.msra.mxu0 0.0
        %1300 = vmatprep.subr.mxu0 0.0
        %1301 = vmatpush1.msra.mxu0 0.0
        %1302 = vmatprep.subr.mxu0 0.0
        %1303 = vmatpush1.msra.mxu0 0.0
        %1304 = vmatprep.subr.mxu0 0.0
        %1305 = vmatpush1.msra.mxu0 0.0
        %1306 = vmatprep.subr.mxu0 0.0
        %1307 = vmatpush1.msra.mxu0 0.0
        %1308 = vmatprep.subr.mxu0 0.0
        %1309 = vmatpush1.msra.mxu0 0.0
        %1310 = vmatprep.subr.mxu0 0.0
        %1311 = vmatpush1.msra.mxu0 0.0
        %1312 = vmatprep.subr.mxu0 0.0
        %1313 = vmatpush1.msra.mxu0 0.0
        %1314 = vmatprep.subr.mxu0 0.0
        %1315 = vmatpush1.msra.mxu0 0.0
        %1316 = vmatprep.subr.mxu0 0.0
        %1317 = vmatpush1.msra.mxu0 0.0
        %1318 = vmatprep.subr.mxu0 0.0
        %1319 = vmatpush1.msra.mxu0 0.0
        %1320 = vmatprep.subr.mxu0 0.0
        %1321 = vmatpush1.msra.mxu0 0.0
        %1322 = vmatprep.subr.mxu0 0.0
        %1323 = vmatpush1.msra.mxu0 0.0
        %1324 = vmatprep.subr.mxu0 0.0
        %1325 = vmatpush1.msra.mxu0 0.0
        %1326 = vmatprep.subr.mxu0 0.0
        %1327 = vmatpush1.msra.mxu0 0.0
        %1328 = vmatprep.subr.mxu0 0.0
        %1329 = vmatpush1.msra.mxu0 0.0
        %1330 = vmatprep.subr.mxu0 0.0
        %1331 = vmatpush1.msra.mxu0 0.0
        %1332 = vmatprep.subr.mxu0 0.0
        %1333 = vmatpush1.msra.mxu0 0.0
        %1334 = vmatprep.subr.mxu0 0.0
        %1335 = vmatpush1.msra.mxu0 0.0
        %1336 = vmatprep.subr.mxu0 0.0
        %1337 = vmatpush1.msra.mxu0 0.0
        %1338 = vmatprep.subr.mxu0 0.0
        %1339 = vmatpush1.msra.mxu0 0.0
        %1340 = vmatprep.subr.mxu0 0.0
        %1341 = vmatpush1.msra.mxu0 0.0
        %1342 = vmatprep.subr.mxu0 0.0
        %1343 = vmatpush1.msra.mxu0 0.0
        %1344 = vmatprep.mubr.f32.mxu0 0.0
        %1345 = vmatmul.mubr.f32.gmra.mrb[0].mxu0 %v1278
        %v1346 = vpop.f32.mrb[0].mxu0
        %v1347 = vadd.f32 %v1275, %v1346
        %v1348 = vpop.f32.mrb[0].mxu0
        %1349 = vdwg.mxu0
        %v1350 = vadd.f32 %v1178, %v1347
        %v1351 = vsel %vm513, %v1350, 0.0
        %1352 = vadd.xlane.f32.xlu0 %v1351
        %v1353 = vpop.xlane.xlu0 %1352
        %v1354 = vmul.f32 %v1353, %v1158
        %v1355 = vsub.f32 %v1350, %v1354
        %v1356 = vmul.f32 %v1355, %v1355
        %v1357 = vsel %vm513, %v1356, 0.0
        %1358 = vadd.xlane.f32.xlu0 %v1357
        %v1359 = vpop.xlane.xlu0 %1358
        %v1360 = vmul.f32 %v1359, %v1158
        %v1361 = vadd.f32 %v1360, 1e-05
        %v1362 = vrsqrt.pop %v1361
        %v1363 = vmul.f32 %v1355, %v1362
        %v1364 = vlaneseq
        %v1365 = vshrl.u32 %v1364, 7
        %v1366 = vsub.s32 4, %v1365
        %v1367 = vrot.slane %v501, %v1366
        %v1368 = vmul.f32 %v1363, %v1367
        %v1369 = vlaneseq
        %v1370 = vshrl.u32 %v1369, 7
        %v1371 = vsub.s32 5, %v1370
        %v1372 = vrot.slane %v501, %v1371
        %v1373 = vadd.f32 %v1368, %v1372
        %1374 = vst.msk [vmem:[#allocation2] sm:$0xff] %vm513, %v1373
        %p1375 = scmp.eq.s32.totalorder %s28, 1
        // Predicated region
        $region61: #{tpu_custom_call.1} parent=55 // pred_check
          %p1376 = pneg %p1375
        $region62: #{tpu_custom_call.1} parent=55 // pred_check_branch
          %1378 = sbr.rel (%p1376) target = $region64
        $region63: #{tpu_custom_call.1} parent=55 // pred_region
          %1379 = vst.msk [vmem:[%s430] sm:$0xff] %vm513, %v1373
        $region64: #{tpu_custom_call.1} parent=55 // pred_fallthru
          _
        %s1380 = sand.u32 %s272, 1
        %s1381 = scalar_lea.sflag [#allocation4], %s1380
        %s1382 = sand.u32 %s272, 1
        %s1383 = smul.addr %s1382, 8
        %s1384 = scalar_lea.vmem [#allocation3], %s1383
        // Predicated region
        $region65: #{tpu_custom_call.1} parent=55 // pred_check
          %p1385 = pneg %p282
        $region66: #{tpu_custom_call.1} parent=55 // pred_check_branch
          %1387 = sbr.rel (%p1385) target = $region68
        $region67: #{tpu_custom_call.1} parent=55 // pred_region
          %s1389 = ssub.s32 128, 128
          %1390 = vsyncadd %s1381, %s1389
          %s1391 = smul.addr %s27, 128
          %s1392 = scalar_lea.hbm %s9, %s1391
          %s1394 = sshll.u32 %s1384, 4
          %s1395 = int_to_ptr.vmem [resolvable:$true] %s1394
          %1397 = dma.vmem_to_hbm [thread:$0]  %s1395, 128, %s1392, %s1381
        $region68: #{tpu_custom_call.1} parent=55 // pred_fallthru
          _
      $region56: #{tpu_custom_call.1} parent=5 // pred_fallthru
        _
      %p1398 = scmp.le.s32.totalorder 2, %s18
      // Predicated region
      $region69: #{tpu_custom_call.1} parent=5 // pred_check
        %p1399 = pneg %p1398
      $region70: #{tpu_custom_call.1} parent=5 // pred_check_branch
        %1401 = sbr.rel (%p1399) target = $region72
      $region71: #{tpu_custom_call.1} parent=5 // pred_region
        %s1402 = ssub.s32 %s18, 2
        // Predicated region
        $region73: #{tpu_custom_call.1} parent=71 // pred_check
          %p1403 = pneg %p288
        $region74: #{tpu_custom_call.1} parent=71 // pred_check_branch
          %1405 = sbr.rel (%p1403) target = $region76
        $region75: #{tpu_custom_call.1} parent=71 // pred_region
          %s1406 = sand.u32 %s273, 1
          %s1407 = scalar_lea.sflag [#allocation4], %s1406
          %s1408 = sand.u32 %s273, 1
          %s1409 = smul.addr %s1408, 8
          %s1410 = scalar_lea.vmem [#allocation3], %s1409
          %1411 = dma.done %s1407, 128
        $region76: #{tpu_custom_call.1} parent=71 // pred_fallthru
          _
      $region72: #{tpu_custom_call.1} parent=5 // pred_fallthru
        _
    $region6: #{tpu_custom_call.1} parent=1 // loop_footer
      %s22 = sadd.s32 1, %s18
    $region7: #{tpu_custom_call.1} parent=1 // loop_footer_branch
      %17 = sbr.rel target = $region3
    $region8: #{tpu_custom_call.1} parent=1 // loop_exit
      _
    %1412 = vsyncpa [#allocation4], 1
    %s1413 = scalar_lea.sflag [#allocation4], 1
    %1414 = vsyncpa %s1413, 1

</llo_original>
